<compile_context>
chip_gen: v7x
topology: tpu7x:2x2x1
jax: 0.10.0
libtpu: 0.0.40
codegen_flags: <defaults>
</compile_context>

<pallas_src>
import jax
import jax.numpy as jnp
from jax import lax
from jax.experimental import pallas as pl
from jax.experimental.pallas import tpu as pltpu


def mlp_kernel(x_ref, w1t_ref, b1_ref, w2t_ref, b2_ref, w3_ref, b3_ref, o_ref):
    # x_ref : (TILE_B, IN)  natural-layout input tile (streamed from HBM)
    # w1t   : (H1, IN), b1: (H1, 1)
    # w2t   : (H2, H1), b2: (H2, 1)
    # w3    : (H2, 1),  b3: (1, 1)
    # o_ref : (1, TILE_B)   lane-dense output tile
    hp = lax.Precision.HIGHEST

    # Layer 1: contract IN of w1t against IN of x (on-chip flip, q@k.T pattern)
    #   (H1, IN) x (TILE_B, IN) -> (H1, TILE_B), f32 MXU accumulation.
    h1 = lax.dot_general(
        w1t_ref[...], x_ref[...],
        dimension_numbers=(((1,), (1,)), ((), ())),
        preferred_element_type=jnp.float32, precision=hp)
    h1 = jnp.maximum(h1 + b1_ref[...], 0.0)

    # Layer 2: (H2, H1) @ (H1, TILE_B) -> (H2, TILE_B).
    h2 = jnp.dot(w2t_ref[...], h1,
                 preferred_element_type=jnp.float32, precision=hp)
    h2 = jnp.maximum(h2 + b2_ref[...], 0.0)

    # Layer 3 (output width 1): VPU multiply + sublane reduction instead of a
    # 1-column MXU matmul; keeps the store lane-dense.
    out = jnp.sum(h2 * w3_ref[...], axis=0, keepdims=True) + b3_ref[...]
    o_ref[...] = out.astype(o_ref.dtype)


def _choose_tile_b(batch, max_tile_b):
    """Pick a lane-dense batch tile.

    - Small batches: one block covering the whole array (no (8,128) issue since
      the block equals the full array dims, and no padding at all).
    - Larger batches: a 128-aligned tile capped at max_tile_b, chosen so the
      grid has >= 2 steps (v7x has 2 TensorCores; a 1-step grid idles half the
      chip).  The ragged final block is masked by Pallas -- no wrapper pad.
    """
    if batch <= 256:
        return batch
    half = pl.cdiv(pl.cdiv(batch, 2), 128) * 128
    return min(max_tile_b, half)


def simple_model_forward(x, params, max_tile_b=4096):
    """SimpleModel forward. x: (batch, input_size) f32 -> (batch, 1) f32."""
    w1, b1, w2, b2, w3, b3 = params
    batch, in_features = x.shape
    hidden1 = w1.shape[1]
    hidden2 = w2.shape[1]

    tile_b = _choose_tile_b(batch, max_tile_b)
    grid = (pl.cdiv(batch, tile_b),)

    # Only the tiny weights/biases get layout plumbing; x streams untouched.
    w1t = w1.T                          # (H1, IN)
    w2t = w2.T                          # (H2, H1)
    b1c = b1.reshape(hidden1, 1)
    b2c = b2.reshape(hidden2, 1)
    w3c = w3.reshape(hidden2, 1)
    b3c = b3.reshape(1, 1)

    resident = lambda i: (0, 0)  # weights/biases stay VMEM-resident across steps

    out = pl.pallas_call(
        mlp_kernel,
        out_shape=jax.ShapeDtypeStruct((1, batch), jnp.float32),
        grid=grid,
        in_specs=[
            pl.BlockSpec((tile_b, in_features), lambda i: (i, 0)),  # streamed x
            pl.BlockSpec((hidden1, in_features), resident),
            pl.BlockSpec((hidden1, 1), resident),
            pl.BlockSpec((hidden2, hidden1), resident),
            pl.BlockSpec((hidden2, 1), resident),
            pl.BlockSpec((hidden2, 1), resident),
            pl.BlockSpec((1, 1), resident),
        ],
        out_specs=pl.BlockSpec((1, tile_b), lambda i: (0, i)),
        compiler_params=pltpu.CompilerParams(
            dimension_semantics=("parallel",),
        ),
    )(x, w1t, b1c, w2t, b2c, w3c, b3c)

    # Back to the module's (batch, 1) output shape.
    return out.reshape(batch, 1)


def init_params(key, input_size):
    # PyTorch-default-style init: U(-1/sqrt(fan_in), 1/sqrt(fan_in)).
    def linear(key, fan_in, fan_out):
        kw, kb = jax.random.split(key)
        bound = 1.0 / jnp.sqrt(fan_in)
        w = jax.random.uniform(kw, (fan_in, fan_out), jnp.float32, -bound, bound)
        b = jax.random.uniform(kb, (1, fan_out), jnp.float32, -bound, bound)
        return w, b

    k1, k2, k3 = jax.random.split(key, 3)
    w1, b1 = linear(k1, input_size, 64)
    w2, b2 = linear(k2, 64, 32)
    w3, b3 = linear(k3, 32, 1)
    return (w1, b1, w2, b2, w3, b3)


if __name__ == "__main__":
    input_size = 32
    batch = 8

    key = jax.random.PRNGKey(0)
    kx, kp = jax.random.split(key)
    x = jax.random.normal(kx, (batch, input_size), dtype=jnp.float32)
    params = init_params(kp, input_size)

    out = simple_model_forward(x, params)
    jax.block_until_ready(out)

    # Pure-JAX reference of the same forward pass (true f32 end-to-end).
    w1, b1, w2, b2, w3, b3 = params
    hp = jax.lax.Precision.HIGHEST
    ref = jnp.maximum(jnp.dot(x, w1, precision=hp) + b1, 0.0)
    ref = jnp.maximum(jnp.dot(ref, w2, precision=hp) + b2, 0.0)
    ref = jnp.dot(ref, w3, precision=hp) + b3

    assert out.shape == (batch, 1)
    assert jnp.allclose(out, ref, atol=1e-4, rtol=1e-4), "mismatch vs reference"

    print("KERNEL_OK")
</pallas_src>

<mosaic_0001>
module attributes {stable_mosaic.version = 11 : i64} {
  func.func @mlp_kernel(%arg0: i32, %arg1: memref<8x32xf32, #tpu.memory_space<vmem>>, %arg2: memref<64x32xf32, #tpu.memory_space<vmem>>, %arg3: memref<64x1xf32, #tpu.memory_space<vmem>>, %arg4: memref<32x64xf32, #tpu.memory_space<vmem>>, %arg5: memref<32x1xf32, #tpu.memory_space<vmem>>, %arg6: memref<32x1xf32, #tpu.memory_space<vmem>>, %arg7: memref<1x1xf32, #tpu.memory_space<vmem>>, %arg8: memref<1x8xf32, #tpu.memory_space<vmem>>) attributes {dimension_semantics = [#tpu.dimension_semantics<parallel>], iteration_bounds = array<i64: 1>, scalar_prefetch = 0 : i64, scratch_operands = 0 : i64, tpu.core_type = #tpu.core_type<tc>, window_params = [{transform_indices = @transform_0, window_bounds = array<i64: 8, 32>}, {pipeline_mode = #tpu.pipeline_mode<synchronous>, transform_indices = @transform_1, window_bounds = array<i64: 64, 32>}, {pipeline_mode = #tpu.pipeline_mode<synchronous>, transform_indices = @transform_2, window_bounds = array<i64: 64, 1>}, {pipeline_mode = #tpu.pipeline_mode<synchronous>, transform_indices = @transform_3, window_bounds = array<i64: 32, 64>}, {pipeline_mode = #tpu.pipeline_mode<synchronous>, transform_indices = @transform_4, window_bounds = array<i64: 32, 1>}, {pipeline_mode = #tpu.pipeline_mode<synchronous>, transform_indices = @transform_5, window_bounds = array<i64: 32, 1>}, {pipeline_mode = #tpu.pipeline_mode<synchronous>, transform_indices = @transform_6, window_bounds = array<i64: 1, 1>}, {transform_indices = @transform_7, window_bounds = array<i64: 1, 8>}]} {
    %c0 = arith.constant 0 : index
    %c0_0 = arith.constant 0 : index
    %0 = vector.load %arg2[%c0, %c0_0] : memref<64x32xf32, #tpu.memory_space<vmem>>, vector<64x32xf32>
    %c0_1 = arith.constant 0 : index
    %c0_2 = arith.constant 0 : index
    %1 = vector.load %arg1[%c0_1, %c0_2] : memref<8x32xf32, #tpu.memory_space<vmem>>, vector<8x32xf32>
    %cst = arith.constant dense<0.000000e+00> : vector<64x8xf32>
    %2 = tpu.matmul %0, %1, %cst {dimension_numbers = #tpu.dot_dimension_numbers<[1], [1], [0], [0], [0, 0, 1, 0], [], []>, precision = #tpu.contract_precision<fp32>} : vector<64x32xf32>, vector<8x32xf32>, vector<64x8xf32> -> vector<64x8xf32>
    %c0_3 = arith.constant 0 : index
    %c0_4 = arith.constant 0 : index
    %3 = vector.load %arg3[%c0_3, %c0_4] : memref<64x1xf32, #tpu.memory_space<vmem>>, vector<64x1xf32>
    %4 = vector.broadcast %3 : vector<64x1xf32> to vector<64x8xf32>
    %5 = arith.addf %2, %4 : vector<64x8xf32>
    %cst_5 = arith.constant 0.000000e+00 : f32
    %6 = vector.broadcast %cst_5 : f32 to vector<64x8xf32>
    %7 = arith.maximumf %5, %6 : vector<64x8xf32>
    %c0_6 = arith.constant 0 : index
    %c0_7 = arith.constant 0 : index
    %8 = vector.load %arg4[%c0_6, %c0_7] : memref<32x64xf32, #tpu.memory_space<vmem>>, vector<32x64xf32>
    %cst_8 = arith.constant dense<0.000000e+00> : vector<32x8xf32>
    %9 = tpu.matmul %8, %7, %cst_8 {dimension_numbers = #tpu.dot_dimension_numbers<[1], [0], [0], [1], [0, 0, 1, 1], [], []>, precision = #tpu.contract_precision<fp32>} : vector<32x64xf32>, vector<64x8xf32>, vector<32x8xf32> -> vector<32x8xf32>
    %c0_9 = arith.constant 0 : index
    %c0_10 = arith.constant 0 : index
    %10 = vector.load %arg5[%c0_9, %c0_10] : memref<32x1xf32, #tpu.memory_space<vmem>>, vector<32x1xf32>
    %11 = vector.broadcast %10 : vector<32x1xf32> to vector<32x8xf32>
    %12 = arith.addf %9, %11 : vector<32x8xf32>
    %cst_11 = arith.constant 0.000000e+00 : f32
    %13 = vector.broadcast %cst_11 : f32 to vector<32x8xf32>
    %14 = arith.maximumf %12, %13 : vector<32x8xf32>
    %c0_12 = arith.constant 0 : index
    %c0_13 = arith.constant 0 : index
    %15 = vector.load %arg6[%c0_12, %c0_13] : memref<32x1xf32, #tpu.memory_space<vmem>>, vector<32x1xf32>
    %16 = vector.broadcast %15 : vector<32x1xf32> to vector<32x8xf32>
    %17 = arith.mulf %14, %16 : vector<32x8xf32>
    %cst_14 = arith.constant dense<0.000000e+00> : vector<8xf32>
    %18 = vector.multi_reduction <add>, %17, %cst_14 [0] : vector<32x8xf32> to vector<8xf32>
    %19 = vector.shape_cast %18 : vector<8xf32> to vector<1x8xf32>
    %c0_15 = arith.constant 0 : index
    %c0_16 = arith.constant 0 : index
    %20 = vector.load %arg7[%c0_15, %c0_16] : memref<1x1xf32, #tpu.memory_space<vmem>>, vector<1x1xf32>
    %21 = vector.broadcast %20 : vector<1x1xf32> to vector<1x8xf32>
    %22 = arith.addf %19, %21 : vector<1x8xf32>
    %c0_17 = arith.constant 0 : index
    %c0_18 = arith.constant 0 : index
    %23 = vector.load %arg8[%c0_17, %c0_18] : memref<1x8xf32, #tpu.memory_space<vmem>>, vector<1x8xf32>
    tpu.vector_store %arg8[%c0_17, %c0_18], %22 {strides = array<i32>} : memref<1x8xf32, #tpu.memory_space<vmem>>, vector<1x8xf32>,
    return
  }
  func.func @transform_0(%arg0: i32) -> (i32, i32) {
    %c0_i32 = arith.constant 0 : i32
    %c0_i32_0 = arith.constant 0 : i32
    return %arg0, %c0_i32 : i32, i32
  }
  func.func @transform_1(%arg0: i32) -> (i32, i32) {
    %c0_i32 = arith.constant 0 : i32
    %c0_i32_0 = arith.constant 0 : i32
    %c0_i32_1 = arith.constant 0 : i32
    return %c0_i32, %c0_i32_0 : i32, i32
  }
  func.func @transform_2(%arg0: i32) -> (i32, i32) {
    %c0_i32 = arith.constant 0 : i32
    %c0_i32_0 = arith.constant 0 : i32
    %c0_i32_1 = arith.constant 0 : i32
    return %c0_i32, %c0_i32_0 : i32, i32
  }
  func.func @transform_3(%arg0: i32) -> (i32, i32) {
    %c0_i32 = arith.constant 0 : i32
    %c0_i32_0 = arith.constant 0 : i32
    %c0_i32_1 = arith.constant 0 : i32
    return %c0_i32, %c0_i32_0 : i32, i32
  }
  func.func @transform_4(%arg0: i32) -> (i32, i32) {
    %c0_i32 = arith.constant 0 : i32
    %c0_i32_0 = arith.constant 0 : i32
    %c0_i32_1 = arith.constant 0 : i32
    return %c0_i32, %c0_i32_0 : i32, i32
  }
  func.func @transform_5(%arg0: i32) -> (i32, i32) {
    %c0_i32 = arith.constant 0 : i32
    %c0_i32_0 = arith.constant 0 : i32
    %c0_i32_1 = arith.constant 0 : i32
    return %c0_i32, %c0_i32_0 : i32, i32
  }
  func.func @transform_6(%arg0: i32) -> (i32, i32) {
    %c0_i32 = arith.constant 0 : i32
    %c0_i32_0 = arith.constant 0 : i32
    %c0_i32_1 = arith.constant 0 : i32
    return %c0_i32, %c0_i32_0 : i32, i32
  }
  func.func @transform_7(%arg0: i32) -> (i32, i32) {
    %c0_i32 = arith.constant 0 : i32
    %c0_i32_0 = arith.constant 0 : i32
    return %c0_i32, %arg0 : i32, i32
  }
}

</mosaic_0001>

<llo_original>
// kernel: tpu_custom_call.1
$region0: #{tpu_custom_call.1}
  #allocation0 [shape = 'u32[]', space=smem, size = 0x4, offset = 0x4, fixed_abs, tag = 'smem constant byte address 0x4 - core index']
  #allocation1 [shape = 'u32[144,128]{1,0:T(1,128)}', space=vmem, size = 0x12000, scoped, tag = 'internal scratch']
  #allocation2 [shape = 'f32[1,1]{1,0:T(1,128)S(1)}', space=vmem, size = 0x200, scoped, tag = 'scoped memory for tpu_custom_call.1']
  %s0 = inlined_call_operand.vmem [shape: f32[8,32], index: 0, kind: input, shape index: {}]
  %s1 = inlined_call_operand.vmem [shape: f32[64,32], index: 1, kind: input, shape index: {}]
  %s2 = inlined_call_operand.vmem [shape: f32[64,1], index: 2, kind: input, shape index: {}]
  %s3 = inlined_call_operand.vmem [shape: f32[32,64], index: 3, kind: input, shape index: {}]
  %s4 = inlined_call_operand.vmem [shape: f32[32,1], index: 4, kind: input, shape index: {}]
  %s5 = inlined_call_operand.vmem [shape: f32[32,1], index: 5, kind: input, shape index: {}]
  %s6 = inlined_call_operand.<no memory space> [shape: f32[1,1], index: 6, kind: input, shape index: {}]
  %s7 = inlined_call_operand.hbm [shape: f32[1,8], index: 7, kind: output, shape index: {}]
  %s8 = sld [smem:[#allocation0]]
  $region38: #{tpu_custom_call.1} parent=0
    _
  %s10 = ssub.s32 1, %s8
  %s11 = scalar_select 0, %s10, %s8
  %v12 = vstv %s6
  %13 = vst [vmem:[#allocation2] sm:$0x1] %v12
  $region1: #{tpu_custom_call.1} parent=0
    #allocation3 [shape = 'u8[512]{0}', space=vmem, size = 0x400, scoped, tag = 'output window, operand 0, single buffered']
    #allocation4 [shape = 's32[1]{0}', space=sflag, size = 0x4, scoped, tag = 'scoped memory for tpu_custom_call.1']
    %14 = vsyncpa [#allocation4], 0
    // Predicated region
    $region2: #{tpu_custom_call.1} parent=1 // pred_check
      _
    $region3: #{tpu_custom_call.1} parent=1 // pred_check_branch
      %16 = sbr.rel (0) target = $region5
    $region4: #{tpu_custom_call.1} parent=1 // pred_region
      _
    $region5: #{tpu_custom_call.1} parent=1 // pred_fallthru
      _
    // Predicated region
    $region6: #{tpu_custom_call.1} parent=1 // pred_check
      _
    $region7: #{tpu_custom_call.1} parent=1 // pred_check_branch
      %18 = sbr.rel (0) target = $region9
    $region8: #{tpu_custom_call.1} parent=1 // pred_region
      _
    $region9: #{tpu_custom_call.1} parent=1 // pred_fallthru
      _
    // Predicated region
    $region10: #{tpu_custom_call.1} parent=1 // pred_check
      _
    $region11: #{tpu_custom_call.1} parent=1 // pred_check_branch
      %20 = sbr.rel (0) target = $region13
    $region12: #{tpu_custom_call.1} parent=1 // pred_region
      _
    $region13: #{tpu_custom_call.1} parent=1 // pred_fallthru
      _
    // Predicated region
    $region14: #{tpu_custom_call.1} parent=1 // pred_check
      _
    $region15: #{tpu_custom_call.1} parent=1 // pred_check_branch
      %22 = sbr.rel (0) target = $region17
    $region16: #{tpu_custom_call.1} parent=1 // pred_region
      _
    $region17: #{tpu_custom_call.1} parent=1 // pred_fallthru
      _
    // Predicated region
    $region18: #{tpu_custom_call.1} parent=1 // pred_check
      _
    $region19: #{tpu_custom_call.1} parent=1 // pred_check_branch
      %24 = sbr.rel (0) target = $region21
    $region20: #{tpu_custom_call.1} parent=1 // pred_region
      _
    $region21: #{tpu_custom_call.1} parent=1 // pred_fallthru
      _
    // Predicated region
    $region22: #{tpu_custom_call.1} parent=1 // pred_check
      _
    $region23: #{tpu_custom_call.1} parent=1 // pred_check_branch
      %26 = sbr.rel (0) target = $region25
    $region24: #{tpu_custom_call.1} parent=1 // pred_region
      _
    $region25: #{tpu_custom_call.1} parent=1 // pred_fallthru
      _
    // Predicated region
    $region26: #{tpu_custom_call.1} parent=1 // pred_check
      _
    $region27: #{tpu_custom_call.1} parent=1 // pred_check_branch
      %28 = sbr.rel (0) target = $region29
    $region28: #{tpu_custom_call.1} parent=1 // pred_region
      _
    $region29: #{tpu_custom_call.1} parent=1 // pred_fallthru
      _
    %v29 = vld [vmem:[%s1] sm:$0xff]
    %v30 = vld [vmem:[%s1 + $0x8] sm:$0xff]
    %v31 = vld [vmem:[%s1 + $0x10] sm:$0xff]
    %v32 = vld [vmem:[%s1 + $0x18] sm:$0xff]
    %v33 = vld [vmem:[%s1 + $0x20] sm:$0xff]
    %v34 = vld [vmem:[%s1 + $0x28] sm:$0xff]
    %v35 = vld [vmem:[%s1 + $0x30] sm:$0xff]
    %v36 = vld [vmem:[%s1 + $0x38] sm:$0xff]
    %v37 = vld [vmem:[%s0] sm:$0xff]
    %v38 = vld [vmem:[%s2] sm:$0xff]
    %v39 = vld [vmem:[%s2 + $0x8] sm:$0xff]
    %v40 = vld [vmem:[%s2 + $0x10] sm:$0xff]
    %v41 = vld [vmem:[%s2 + $0x18] sm:$0xff]
    %v42 = vld [vmem:[%s2 + $0x20] sm:$0xff]
    %v43 = vld [vmem:[%s2 + $0x28] sm:$0xff]
    %v44 = vld [vmem:[%s2 + $0x30] sm:$0xff]
    %v45 = vld [vmem:[%s2 + $0x38] sm:$0xff]
    %47 = vset.pattern.permute.xlu0 0
    %48 = vperm.xlu0 %47, %v38
    %v49 = vpop.permute.xlu0 %48
    %52 = vset.pattern.permute.xlu0 0
    %53 = vperm.xlu0 %52, %v39
    %v54 = vpop.permute.xlu0 %53
    %57 = vset.pattern.permute.xlu0 0
    %58 = vperm.xlu0 %57, %v40
    %v59 = vpop.permute.xlu0 %58
    %62 = vset.pattern.permute.xlu0 0
    %63 = vperm.xlu0 %62, %v41
    %v64 = vpop.permute.xlu0 %63
    %67 = vset.pattern.permute.xlu0 0
    %68 = vperm.xlu0 %67, %v42
    %v69 = vpop.permute.xlu0 %68
    %72 = vset.pattern.permute.xlu0 0
    %73 = vperm.xlu0 %72, %v43
    %v74 = vpop.permute.xlu0 %73
    %77 = vset.pattern.permute.xlu0 0
    %78 = vperm.xlu0 %77, %v44
    %v79 = vpop.permute.xlu0 %78
    %82 = vset.pattern.permute.xlu0 0
    %83 = vperm.xlu0 %82, %v45
    %v84 = vpop.permute.xlu0 %83
    %vm86 = vcmask 261120
    %v88 = vsel %vm86, %v29, 0
    %v91 = vsel %vm86, %v30, 0
    %v94 = vsel %vm86, %v31, 0
    %v97 = vsel %vm86, %v32, 0
    %v100 = vsel %vm86, %v33, 0
    %v103 = vsel %vm86, %v34, 0
    %v106 = vsel %vm86, %v35, 0
    %v109 = vsel %vm86, %v36, 0
    %v112 = vsel %vm86, %v37, 0
    %114 = vmatprep.subr.mxu0 0.0
    %v115 = vand.u32 %v112, 4294901760
    %116 = vmatpush1.xpose.msra.mxu0 %v115
    %117 = vmatprep.subr.mxu0 0.0
    %118 = vmatpush1.xpose.msra.mxu0 0.0
    %119 = vmatprep.subr.mxu0 0.0
    %120 = vmatpush1.xpose.msra.mxu0 0.0
    %121 = vmatprep.subr.mxu0 0.0
    %122 = vmatpush1.xpose.msra.mxu0 0.0
    %123 = vmatprep.subr.mxu0 0.0
    %124 = vmatpush1.xpose.msra.mxu0 0.0
    %125 = vmatprep.subr.mxu0 0.0
    %126 = vmatpush1.xpose.msra.mxu0 0.0
    %127 = vmatprep.subr.mxu0 0.0
    %128 = vmatpush1.xpose.msra.mxu0 0.0
    %129 = vmatprep.subr.mxu0 0.0
    %130 = vmatpush1.xpose.msra.mxu0 0.0
    %131 = vmatprep.subr.mxu0 0.0
    %132 = vmatpush1.xpose.msra.mxu0 0.0
    %133 = vmatprep.subr.mxu0 0.0
    %134 = vmatpush1.xpose.msra.mxu0 0.0
    %135 = vmatprep.subr.mxu0 0.0
    %136 = vmatpush1.xpose.msra.mxu0 0.0
    %137 = vmatprep.subr.mxu0 0.0
    %138 = vmatpush1.xpose.msra.mxu0 0.0
    %139 = vmatprep.subr.mxu0 0.0
    %140 = vmatpush1.xpose.msra.mxu0 0.0
    %141 = vmatprep.subr.mxu0 0.0
    %142 = vmatpush1.xpose.msra.mxu0 0.0
    %143 = vmatprep.subr.mxu0 0.0
    %144 = vmatpush1.xpose.msra.mxu0 0.0
    %145 = vmatprep.subr.mxu0 0.0
    %146 = vmatpush1.xpose.msra.mxu0 0.0
    %147 = vmatprep.subr.mxu0 0.0
    %148 = vmatpush1.xpose.msra.mxu0 0.0
    %149 = vmatprep.subr.mxu0 0.0
    %150 = vmatpush1.xpose.msra.mxu0 0.0
    %151 = vmatprep.subr.mxu0 0.0
    %152 = vmatpush1.xpose.msra.mxu0 0.0
    %153 = vmatprep.subr.mxu0 0.0
    %154 = vmatpush1.xpose.msra.mxu0 0.0
    %155 = vmatprep.subr.mxu0 0.0
    %156 = vmatpush1.xpose.msra.mxu0 0.0
    %157 = vmatprep.subr.mxu0 0.0
    %158 = vmatpush1.xpose.msra.mxu0 0.0
    %159 = vmatprep.subr.mxu0 0.0
    %160 = vmatpush1.xpose.msra.mxu0 0.0
    %161 = vmatprep.subr.mxu0 0.0
    %162 = vmatpush1.xpose.msra.mxu0 0.0
    %163 = vmatprep.subr.mxu0 0.0
    %164 = vmatpush1.xpose.msra.mxu0 0.0
    %165 = vmatprep.subr.mxu0 0.0
    %166 = vmatpush1.xpose.msra.mxu0 0.0
    %167 = vmatprep.subr.mxu0 0.0
    %168 = vmatpush1.xpose.msra.mxu0 0.0
    %169 = vmatprep.subr.mxu0 0.0
    %170 = vmatpush1.xpose.msra.mxu0 0.0
    %171 = vmatprep.subr.mxu0 0.0
    %172 = vmatpush1.xpose.msra.mxu0 0.0
    %173 = vmatprep.subr.mxu0 0.0
    %174 = vmatpush1.xpose.msra.mxu0 0.0
    %175 = vmatprep.subr.mxu0 0.0
    %176 = vmatpush1.xpose.msra.mxu0 0.0
    %177 = vmatprep.subr.mxu0 0.0
    %178 = vmatpush1.xpose.msra.mxu0 0.0
    %179 = vmatprep.mubr.f32.mxu0 0.0
    %v180 = vand.u32 %v88, 4294901760
    %v181 = vsub.f32 %v88, %v180
    %v182 = vand.u32 %v181, 4294901760
    %v183 = vsub.f32 %v181, %v182
    %v184 = vand.u32 %v183, 4294901760
    %185 = vmatmul.mubr.f32.gmra.mrb[0].mxu0 %v184
    %v186 = vpop.f32.mrb[0].mxu0
    %v187 = vadd.f32 %v49, %v186
    %v188 = vpop.f32.mrb[0].mxu0
    %189 = vmatprep.mubr.f32.mxu0 0.0
    %v190 = vand.u32 %v91, 4294901760
    %v191 = vsub.f32 %v91, %v190
    %v192 = vand.u32 %v191, 4294901760
    %v193 = vsub.f32 %v191, %v192
    %v194 = vand.u32 %v193, 4294901760
    %195 = vmatmul.mubr.f32.gmra.mrb[0].mxu0 %v194
    %v196 = vpop.f32.mrb[0].mxu0
    %v197 = vadd.f32 %v54, %v196
    %v198 = vpop.f32.mrb[0].mxu0
    %199 = vmatprep.mubr.f32.mxu0 0.0
    %v200 = vand.u32 %v94, 4294901760
    %v201 = vsub.f32 %v94, %v200
    %v202 = vand.u32 %v201, 4294901760
    %v203 = vsub.f32 %v201, %v202
    %v204 = vand.u32 %v203, 4294901760
    %205 = vmatmul.mubr.f32.gmra.mrb[0].mxu0 %v204
    %v206 = vpop.f32.mrb[0].mxu0
    %v207 = vadd.f32 %v59, %v206
    %v208 = vpop.f32.mrb[0].mxu0
    %209 = vmatprep.mubr.f32.mxu0 0.0
    %v210 = vand.u32 %v97, 4294901760
    %v211 = vsub.f32 %v97, %v210
    %v212 = vand.u32 %v211, 4294901760
    %v213 = vsub.f32 %v211, %v212
    %v214 = vand.u32 %v213, 4294901760
    %215 = vmatmul.mubr.f32.gmra.mrb[0].mxu0 %v214
    %v216 = vpop.f32.mrb[0].mxu0
    %v217 = vadd.f32 %v64, %v216
    %v218 = vpop.f32.mrb[0].mxu0
    %219 = vmatprep.mubr.f32.mxu0 0.0
    %v220 = vand.u32 %v100, 4294901760
    %v221 = vsub.f32 %v100, %v220
    %v222 = vand.u32 %v221, 4294901760
    %v223 = vsub.f32 %v221, %v222
    %v224 = vand.u32 %v223, 4294901760
    %225 = vmatmul.mubr.f32.gmra.mrb[0].mxu0 %v224
    %v226 = vpop.f32.mrb[0].mxu0
    %v227 = vadd.f32 %v69, %v226
    %v228 = vpop.f32.mrb[0].mxu0
    %229 = vmatprep.mubr.f32.mxu0 0.0
    %v230 = vand.u32 %v103, 4294901760
    %v231 = vsub.f32 %v103, %v230
    %v232 = vand.u32 %v231, 4294901760
    %v233 = vsub.f32 %v231, %v232
    %v234 = vand.u32 %v233, 4294901760
    %235 = vmatmul.mubr.f32.gmra.mrb[0].mxu0 %v234
    %v236 = vpop.f32.mrb[0].mxu0
    %v237 = vadd.f32 %v74, %v236
    %v238 = vpop.f32.mrb[0].mxu0
    %239 = vmatprep.mubr.f32.mxu0 0.0
    %v240 = vand.u32 %v106, 4294901760
    %v241 = vsub.f32 %v106, %v240
    %v242 = vand.u32 %v241, 4294901760
    %v243 = vsub.f32 %v241, %v242
    %v244 = vand.u32 %v243, 4294901760
    %245 = vmatmul.mubr.f32.gmra.mrb[0].mxu0 %v244
    %v246 = vpop.f32.mrb[0].mxu0
    %v247 = vadd.f32 %v79, %v246
    %v248 = vpop.f32.mrb[0].mxu0
    %249 = vmatprep.mubr.f32.mxu0 0.0
    %v250 = vand.u32 %v109, 4294901760
    %v251 = vsub.f32 %v109, %v250
    %v252 = vand.u32 %v251, 4294901760
    %v253 = vsub.f32 %v251, %v252
    %v254 = vand.u32 %v253, 4294901760
    %255 = vmatmul.mubr.f32.gmra.mrb[0].mxu0 %v254
    %v256 = vpop.f32.mrb[0].mxu0
    %v257 = vadd.f32 %v84, %v256
    %v258 = vpop.f32.mrb[0].mxu0
    %259 = vdwg.mxu0
    %260 = vmatprep.subr.mxu0 0.0
    %v261 = vand.u32 %v112, 4294901760
    %v262 = vsub.f32 %v112, %v261
    %v263 = vand.u32 %v262, 4294901760
    %v264 = vsub.f32 %v262, %v263
    %v265 = vand.u32 %v264, 4294901760
    %266 = vmatpush1.xpose.msra.mxu0 %v265
    %267 = vmatprep.subr.mxu0 0.0
    %268 = vmatpush1.xpose.msra.mxu0 0.0
    %269 = vmatprep.subr.mxu0 0.0
    %270 = vmatpush1.xpose.msra.mxu0 0.0
    %271 = vmatprep.subr.mxu0 0.0
    %272 = vmatpush1.xpose.msra.mxu0 0.0
    %273 = vmatprep.subr.mxu0 0.0
    %274 = vmatpush1.xpose.msra.mxu0 0.0
    %275 = vmatprep.subr.mxu0 0.0
    %276 = vmatpush1.xpose.msra.mxu0 0.0
    %277 = vmatprep.subr.mxu0 0.0
    %278 = vmatpush1.xpose.msra.mxu0 0.0
    %279 = vmatprep.subr.mxu0 0.0
    %280 = vmatpush1.xpose.msra.mxu0 0.0
    %281 = vmatprep.subr.mxu0 0.0
    %282 = vmatpush1.xpose.msra.mxu0 0.0
    %283 = vmatprep.subr.mxu0 0.0
    %284 = vmatpush1.xpose.msra.mxu0 0.0
    %285 = vmatprep.subr.mxu0 0.0
    %286 = vmatpush1.xpose.msra.mxu0 0.0
    %287 = vmatprep.subr.mxu0 0.0
    %288 = vmatpush1.xpose.msra.mxu0 0.0
    %289 = vmatprep.subr.mxu0 0.0
    %290 = vmatpush1.xpose.msra.mxu0 0.0
    %291 = vmatprep.subr.mxu0 0.0
    %292 = vmatpush1.xpose.msra.mxu0 0.0
    %293 = vmatprep.subr.mxu0 0.0
    %294 = vmatpush1.xpose.msra.mxu0 0.0
    %295 = vmatprep.subr.mxu0 0.0
    %296 = vmatpush1.xpose.msra.mxu0 0.0
    %297 = vmatprep.subr.mxu0 0.0
    %298 = vmatpush1.xpose.msra.mxu0 0.0
    %299 = vmatprep.subr.mxu0 0.0
    %300 = vmatpush1.xpose.msra.mxu0 0.0
    %301 = vmatprep.subr.mxu0 0.0
    %302 = vmatpush1.xpose.msra.mxu0 0.0
    %303 = vmatprep.subr.mxu0 0.0
    %304 = vmatpush1.xpose.msra.mxu0 0.0
    %305 = vmatprep.subr.mxu0 0.0
    %306 = vmatpush1.xpose.msra.mxu0 0.0
    %307 = vmatprep.subr.mxu0 0.0
    %308 = vmatpush1.xpose.msra.mxu0 0.0
    %309 = vmatprep.subr.mxu0 0.0
    %310 = vmatpush1.xpose.msra.mxu0 0.0
    %311 = vmatprep.subr.mxu0 0.0
    %312 = vmatpush1.xpose.msra.mxu0 0.0
    %313 = vmatprep.subr.mxu0 0.0
    %314 = vmatpush1.xpose.msra.mxu0 0.0
    %315 = vmatprep.subr.mxu0 0.0
    %316 = vmatpush1.xpose.msra.mxu0 0.0
    %317 = vmatprep.subr.mxu0 0.0
    %318 = vmatpush1.xpose.msra.mxu0 0.0
    %319 = vmatprep.subr.mxu0 0.0
    %320 = vmatpush1.xpose.msra.mxu0 0.0
    %321 = vmatprep.subr.mxu0 0.0
    %322 = vmatpush1.xpose.msra.mxu0 0.0
    %323 = vmatprep.subr.mxu0 0.0
    %324 = vmatpush1.xpose.msra.mxu0 0.0
    %325 = vmatprep.subr.mxu0 0.0
    %326 = vmatpush1.xpose.msra.mxu0 0.0
    %327 = vmatprep.subr.mxu0 0.0
    %328 = vmatpush1.xpose.msra.mxu0 0.0
    %329 = vmatprep.mubr.f32.mxu0 0.0
    %v330 = vand.u32 %v88, 4294901760
    %331 = vmatmul.mubr.f32.gmra.mrb[0].mxu0 %v330
    %v332 = vpop.f32.mrb[0].mxu0
    %v333 = vadd.f32 %v187, %v332
    %v334 = vpop.f32.mrb[0].mxu0
    %335 = vmatprep.mubr.f32.mxu0 0.0
    %v336 = vand.u32 %v91, 4294901760
    %337 = vmatmul.mubr.f32.gmra.mrb[0].mxu0 %v336
    %v338 = vpop.f32.mrb[0].mxu0
    %v339 = vadd.f32 %v197, %v338
    %v340 = vpop.f32.mrb[0].mxu0
    %341 = vmatprep.mubr.f32.mxu0 0.0
    %v342 = vand.u32 %v94, 4294901760
    %343 = vmatmul.mubr.f32.gmra.mrb[0].mxu0 %v342
    %v344 = vpop.f32.mrb[0].mxu0
    %v345 = vadd.f32 %v207, %v344
    %v346 = vpop.f32.mrb[0].mxu0
    %347 = vmatprep.mubr.f32.mxu0 0.0
    %v348 = vand.u32 %v97, 4294901760
    %349 = vmatmul.mubr.f32.gmra.mrb[0].mxu0 %v348
    %v350 = vpop.f32.mrb[0].mxu0
    %v351 = vadd.f32 %v217, %v350
    %v352 = vpop.f32.mrb[0].mxu0
    %353 = vmatprep.mubr.f32.mxu0 0.0
    %v354 = vand.u32 %v100, 4294901760
    %355 = vmatmul.mubr.f32.gmra.mrb[0].mxu0 %v354
    %v356 = vpop.f32.mrb[0].mxu0
    %v357 = vadd.f32 %v227, %v356
    %v358 = vpop.f32.mrb[0].mxu0
    %359 = vmatprep.mubr.f32.mxu0 0.0
    %v360 = vand.u32 %v103, 4294901760
    %361 = vmatmul.mubr.f32.gmra.mrb[0].mxu0 %v360
    %v362 = vpop.f32.mrb[0].mxu0
    %v363 = vadd.f32 %v237, %v362
    %v364 = vpop.f32.mrb[0].mxu0
    %365 = vmatprep.mubr.f32.mxu0 0.0
    %v366 = vand.u32 %v106, 4294901760
    %367 = vmatmul.mubr.f32.gmra.mrb[0].mxu0 %v366
    %v368 = vpop.f32.mrb[0].mxu0
    %v369 = vadd.f32 %v247, %v368
    %v370 = vpop.f32.mrb[0].mxu0
    %371 = vmatprep.mubr.f32.mxu0 0.0
    %v372 = vand.u32 %v109, 4294901760
    %373 = vmatmul.mubr.f32.gmra.mrb[0].mxu0 %v372
    %v374 = vpop.f32.mrb[0].mxu0
    %v375 = vadd.f32 %v257, %v374
    %v376 = vpop.f32.mrb[0].mxu0
    %377 = vdwg.mxu0
    %378 = vmatprep.subr.mxu0 0.0
    %v379 = vand.u32 %v112, 4294901760
    %v380 = vsub.f32 %v112, %v379
    %381 = vmatpush1.xpose.msra.mxu0 %v380
    %382 = vmatprep.subr.mxu0 0.0
    %383 = vmatpush1.xpose.msra.mxu0 0.0
    %384 = vmatprep.subr.mxu0 0.0
    %385 = vmatpush1.xpose.msra.mxu0 0.0
    %386 = vmatprep.subr.mxu0 0.0
    %387 = vmatpush1.xpose.msra.mxu0 0.0
    %388 = vmatprep.subr.mxu0 0.0
    %389 = vmatpush1.xpose.msra.mxu0 0.0
    %390 = vmatprep.subr.mxu0 0.0
    %391 = vmatpush1.xpose.msra.mxu0 0.0
    %392 = vmatprep.subr.mxu0 0.0
    %393 = vmatpush1.xpose.msra.mxu0 0.0
    %394 = vmatprep.subr.mxu0 0.0
    %395 = vmatpush1.xpose.msra.mxu0 0.0
    %396 = vmatprep.subr.mxu0 0.0
    %397 = vmatpush1.xpose.msra.mxu0 0.0
    %398 = vmatprep.subr.mxu0 0.0
    %399 = vmatpush1.xpose.msra.mxu0 0.0
    %400 = vmatprep.subr.mxu0 0.0
    %401 = vmatpush1.xpose.msra.mxu0 0.0
    %402 = vmatprep.subr.mxu0 0.0
    %403 = vmatpush1.xpose.msra.mxu0 0.0
    %404 = vmatprep.subr.mxu0 0.0
    %405 = vmatpush1.xpose.msra.mxu0 0.0
    %406 = vmatprep.subr.mxu0 0.0
    %407 = vmatpush1.xpose.msra.mxu0 0.0
    %408 = vmatprep.subr.mxu0 0.0
    %409 = vmatpush1.xpose.msra.mxu0 0.0
    %410 = vmatprep.subr.mxu0 0.0
    %411 = vmatpush1.xpose.msra.mxu0 0.0
    %412 = vmatprep.subr.mxu0 0.0
    %413 = vmatpush1.xpose.msra.mxu0 0.0
    %414 = vmatprep.subr.mxu0 0.0
    %415 = vmatpush1.xpose.msra.mxu0 0.0
    %416 = vmatprep.subr.mxu0 0.0
    %417 = vmatpush1.xpose.msra.mxu0 0.0
    %418 = vmatprep.subr.mxu0 0.0
    %419 = vmatpush1.xpose.msra.mxu0 0.0
    %420 = vmatprep.subr.mxu0 0.0
    %421 = vmatpush1.xpose.msra.mxu0 0.0
    %422 = vmatprep.subr.mxu0 0.0
    %423 = vmatpush1.xpose.msra.mxu0 0.0
    %424 = vmatprep.subr.mxu0 0.0
    %425 = vmatpush1.xpose.msra.mxu0 0.0
    %426 = vmatprep.subr.mxu0 0.0
    %427 = vmatpush1.xpose.msra.mxu0 0.0
    %428 = vmatprep.subr.mxu0 0.0
    %429 = vmatpush1.xpose.msra.mxu0 0.0
    %430 = vmatprep.subr.mxu0 0.0
    %431 = vmatpush1.xpose.msra.mxu0 0.0
    %432 = vmatprep.subr.mxu0 0.0
    %433 = vmatpush1.xpose.msra.mxu0 0.0
    %434 = vmatprep.subr.mxu0 0.0
    %435 = vmatpush1.xpose.msra.mxu0 0.0
    %436 = vmatprep.subr.mxu0 0.0
    %437 = vmatpush1.xpose.msra.mxu0 0.0
    %438 = vmatprep.subr.mxu0 0.0
    %439 = vmatpush1.xpose.msra.mxu0 0.0
    %440 = vmatprep.subr.mxu0 0.0
    %441 = vmatpush1.xpose.msra.mxu0 0.0
    %442 = vmatprep.subr.mxu0 0.0
    %443 = vmatpush1.xpose.msra.mxu0 0.0
    %444 = vmatprep.mubr.f32.mxu0 0.0
    %v445 = vand.u32 %v88, 4294901760
    %v446 = vsub.f32 %v88, %v445
    %447 = vmatmul.mubr.f32.gmra.mrb[0].mxu0 %v446
    %v448 = vpop.f32.mrb[0].mxu0
    %v449 = vadd.f32 %v333, %v448
    %v450 = vpop.f32.mrb[0].mxu0
    %451 = vmatprep.mubr.f32.mxu0 0.0
    %v452 = vand.u32 %v91, 4294901760
    %v453 = vsub.f32 %v91, %v452
    %454 = vmatmul.mubr.f32.gmra.mrb[0].mxu0 %v453
    %v455 = vpop.f32.mrb[0].mxu0
    %v456 = vadd.f32 %v339, %v455
    %v457 = vpop.f32.mrb[0].mxu0
    %458 = vmatprep.mubr.f32.mxu0 0.0
    %v459 = vand.u32 %v94, 4294901760
    %v460 = vsub.f32 %v94, %v459
    %461 = vmatmul.mubr.f32.gmra.mrb[0].mxu0 %v460
    %v462 = vpop.f32.mrb[0].mxu0
    %v463 = vadd.f32 %v345, %v462
    %v464 = vpop.f32.mrb[0].mxu0
    %465 = vmatprep.mubr.f32.mxu0 0.0
    %v466 = vand.u32 %v97, 4294901760
    %v467 = vsub.f32 %v97, %v466
    %468 = vmatmul.mubr.f32.gmra.mrb[0].mxu0 %v467
    %v469 = vpop.f32.mrb[0].mxu0
    %v470 = vadd.f32 %v351, %v469
    %v471 = vpop.f32.mrb[0].mxu0
    %472 = vmatprep.mubr.f32.mxu0 0.0
    %v473 = vand.u32 %v100, 4294901760
    %v474 = vsub.f32 %v100, %v473
    %475 = vmatmul.mubr.f32.gmra.mrb[0].mxu0 %v474
    %v476 = vpop.f32.mrb[0].mxu0
    %v477 = vadd.f32 %v357, %v476
    %v478 = vpop.f32.mrb[0].mxu0
    %479 = vmatprep.mubr.f32.mxu0 0.0
    %v480 = vand.u32 %v103, 4294901760
    %v481 = vsub.f32 %v103, %v480
    %482 = vmatmul.mubr.f32.gmra.mrb[0].mxu0 %v481
    %v483 = vpop.f32.mrb[0].mxu0
    %v484 = vadd.f32 %v363, %v483
    %v485 = vpop.f32.mrb[0].mxu0
    %486 = vmatprep.mubr.f32.mxu0 0.0
    %v487 = vand.u32 %v106, 4294901760
    %v488 = vsub.f32 %v106, %v487
    %489 = vmatmul.mubr.f32.gmra.mrb[0].mxu0 %v488
    %v490 = vpop.f32.mrb[0].mxu0
    %v491 = vadd.f32 %v369, %v490
    %v492 = vpop.f32.mrb[0].mxu0
    %493 = vmatprep.mubr.f32.mxu0 0.0
    %v494 = vand.u32 %v109, 4294901760
    %v495 = vsub.f32 %v109, %v494
    %496 = vmatmul.mubr.f32.gmra.mrb[0].mxu0 %v495
    %v497 = vpop.f32.mrb[0].mxu0
    %v498 = vadd.f32 %v375, %v497
    %v499 = vpop.f32.mrb[0].mxu0
    %500 = vdwg.mxu0
    %501 = vmatprep.subr.mxu0 0.0
    %v502 = vand.u32 %v112, 4294901760
    %503 = vmatpush1.xpose.msra.mxu0 %v502
    %504 = vmatprep.subr.mxu0 0.0
    %505 = vmatpush1.xpose.msra.mxu0 0.0
    %506 = vmatprep.subr.mxu0 0.0
    %507 = vmatpush1.xpose.msra.mxu0 0.0
    %508 = vmatprep.subr.mxu0 0.0
    %509 = vmatpush1.xpose.msra.mxu0 0.0
    %510 = vmatprep.subr.mxu0 0.0
    %511 = vmatpush1.xpose.msra.mxu0 0.0
    %512 = vmatprep.subr.mxu0 0.0
    %513 = vmatpush1.xpose.msra.mxu0 0.0
    %514 = vmatprep.subr.mxu0 0.0
    %515 = vmatpush1.xpose.msra.mxu0 0.0
    %516 = vmatprep.subr.mxu0 0.0
    %517 = vmatpush1.xpose.msra.mxu0 0.0
    %518 = vmatprep.subr.mxu0 0.0
    %519 = vmatpush1.xpose.msra.mxu0 0.0
    %520 = vmatprep.subr.mxu0 0.0
    %521 = vmatpush1.xpose.msra.mxu0 0.0
    %522 = vmatprep.subr.mxu0 0.0
    %523 = vmatpush1.xpose.msra.mxu0 0.0
    %524 = vmatprep.subr.mxu0 0.0
    %525 = vmatpush1.xpose.msra.mxu0 0.0
    %526 = vmatprep.subr.mxu0 0.0
    %527 = vmatpush1.xpose.msra.mxu0 0.0
    %528 = vmatprep.subr.mxu0 0.0
    %529 = vmatpush1.xpose.msra.mxu0 0.0
    %530 = vmatprep.subr.mxu0 0.0
    %531 = vmatpush1.xpose.msra.mxu0 0.0
    %532 = vmatprep.subr.mxu0 0.0
    %533 = vmatpush1.xpose.msra.mxu0 0.0
    %534 = vmatprep.subr.mxu0 0.0
    %535 = vmatpush1.xpose.msra.mxu0 0.0
    %536 = vmatprep.subr.mxu0 0.0
    %537 = vmatpush1.xpose.msra.mxu0 0.0
    %538 = vmatprep.subr.mxu0 0.0
    %539 = vmatpush1.xpose.msra.mxu0 0.0
    %540 = vmatprep.subr.mxu0 0.0
    %541 = vmatpush1.xpose.msra.mxu0 0.0
    %542 = vmatprep.subr.mxu0 0.0
    %543 = vmatpush1.xpose.msra.mxu0 0.0
    %544 = vmatprep.subr.mxu0 0.0
    %545 = vmatpush1.xpose.msra.mxu0 0.0
    %546 = vmatprep.subr.mxu0 0.0
    %547 = vmatpush1.xpose.msra.mxu0 0.0
    %548 = vmatprep.subr.mxu0 0.0
    %549 = vmatpush1.xpose.msra.mxu0 0.0
    %550 = vmatprep.subr.mxu0 0.0
    %551 = vmatpush1.xpose.msra.mxu0 0.0
    %552 = vmatprep.subr.mxu0 0.0
    %553 = vmatpush1.xpose.msra.mxu0 0.0
    %554 = vmatprep.subr.mxu0 0.0
    %555 = vmatpush1.xpose.msra.mxu0 0.0
    %556 = vmatprep.subr.mxu0 0.0
    %557 = vmatpush1.xpose.msra.mxu0 0.0
    %558 = vmatprep.subr.mxu0 0.0
    %559 = vmatpush1.xpose.msra.mxu0 0.0
    %560 = vmatprep.subr.mxu0 0.0
    %561 = vmatpush1.xpose.msra.mxu0 0.0
    %562 = vmatprep.subr.mxu0 0.0
    %563 = vmatpush1.xpose.msra.mxu0 0.0
    %564 = vmatprep.subr.mxu0 0.0
    %565 = vmatpush1.xpose.msra.mxu0 0.0
    %566 = vmatprep.mubr.f32.mxu0 0.0
    %v567 = vand.u32 %v88, 4294901760
    %v568 = vsub.f32 %v88, %v567
    %v569 = vand.u32 %v568, 4294901760
    %570 = vmatmul.mubr.f32.gmra.mrb[0].mxu0 %v569
    %v571 = vpop.f32.mrb[0].mxu0
    %v572 = vadd.f32 %v449, %v571
    %v573 = vpop.f32.mrb[0].mxu0
    %574 = vmatprep.mubr.f32.mxu0 0.0
    %v575 = vand.u32 %v91, 4294901760
    %v576 = vsub.f32 %v91, %v575
    %v577 = vand.u32 %v576, 4294901760
    %578 = vmatmul.mubr.f32.gmra.mrb[0].mxu0 %v577
    %v579 = vpop.f32.mrb[0].mxu0
    %v580 = vadd.f32 %v456, %v579
    %v581 = vpop.f32.mrb[0].mxu0
    %582 = vmatprep.mubr.f32.mxu0 0.0
    %v583 = vand.u32 %v94, 4294901760
    %v584 = vsub.f32 %v94, %v583
    %v585 = vand.u32 %v584, 4294901760
    %586 = vmatmul.mubr.f32.gmra.mrb[0].mxu0 %v585
    %v587 = vpop.f32.mrb[0].mxu0
    %v588 = vadd.f32 %v463, %v587
    %v589 = vpop.f32.mrb[0].mxu0
    %590 = vmatprep.mubr.f32.mxu0 0.0
    %v591 = vand.u32 %v97, 4294901760
    %v592 = vsub.f32 %v97, %v591
    %v593 = vand.u32 %v592, 4294901760
    %594 = vmatmul.mubr.f32.gmra.mrb[0].mxu0 %v593
    %v595 = vpop.f32.mrb[0].mxu0
    %v596 = vadd.f32 %v470, %v595
    %v597 = vpop.f32.mrb[0].mxu0
    %598 = vmatprep.mubr.f32.mxu0 0.0
    %v599 = vand.u32 %v100, 4294901760
    %v600 = vsub.f32 %v100, %v599
    %v601 = vand.u32 %v600, 4294901760
    %602 = vmatmul.mubr.f32.gmra.mrb[0].mxu0 %v601
    %v603 = vpop.f32.mrb[0].mxu0
    %v604 = vadd.f32 %v477, %v603
    %v605 = vpop.f32.mrb[0].mxu0
    %606 = vmatprep.mubr.f32.mxu0 0.0
    %v607 = vand.u32 %v103, 4294901760
    %v608 = vsub.f32 %v103, %v607
    %v609 = vand.u32 %v608, 4294901760
    %610 = vmatmul.mubr.f32.gmra.mrb[0].mxu0 %v609
    %v611 = vpop.f32.mrb[0].mxu0
    %v612 = vadd.f32 %v484, %v611
    %v613 = vpop.f32.mrb[0].mxu0
    %614 = vmatprep.mubr.f32.mxu0 0.0
    %v615 = vand.u32 %v106, 4294901760
    %v616 = vsub.f32 %v106, %v615
    %v617 = vand.u32 %v616, 4294901760
    %618 = vmatmul.mubr.f32.gmra.mrb[0].mxu0 %v617
    %v619 = vpop.f32.mrb[0].mxu0
    %v620 = vadd.f32 %v491, %v619
    %v621 = vpop.f32.mrb[0].mxu0
    %622 = vmatprep.mubr.f32.mxu0 0.0
    %v623 = vand.u32 %v109, 4294901760
    %v624 = vsub.f32 %v109, %v623
    %v625 = vand.u32 %v624, 4294901760
    %626 = vmatmul.mubr.f32.gmra.mrb[0].mxu0 %v625
    %v627 = vpop.f32.mrb[0].mxu0
    %v628 = vadd.f32 %v498, %v627
    %v629 = vpop.f32.mrb[0].mxu0
    %630 = vdwg.mxu0
    %631 = vmatprep.subr.mxu0 0.0
    %v632 = vand.u32 %v112, 4294901760
    %v633 = vsub.f32 %v112, %v632
    %v634 = vand.u32 %v633, 4294901760
    %635 = vmatpush1.xpose.msra.mxu0 %v634
    %636 = vmatprep.subr.mxu0 0.0
    %637 = vmatpush1.xpose.msra.mxu0 0.0
    %638 = vmatprep.subr.mxu0 0.0
    %639 = vmatpush1.xpose.msra.mxu0 0.0
    %640 = vmatprep.subr.mxu0 0.0
    %641 = vmatpush1.xpose.msra.mxu0 0.0
    %642 = vmatprep.subr.mxu0 0.0
    %643 = vmatpush1.xpose.msra.mxu0 0.0
    %644 = vmatprep.subr.mxu0 0.0
    %645 = vmatpush1.xpose.msra.mxu0 0.0
    %646 = vmatprep.subr.mxu0 0.0
    %647 = vmatpush1.xpose.msra.mxu0 0.0
    %648 = vmatprep.subr.mxu0 0.0
    %649 = vmatpush1.xpose.msra.mxu0 0.0
    %650 = vmatprep.subr.mxu0 0.0
    %651 = vmatpush1.xpose.msra.mxu0 0.0
    %652 = vmatprep.subr.mxu0 0.0
    %653 = vmatpush1.xpose.msra.mxu0 0.0
    %654 = vmatprep.subr.mxu0 0.0
    %655 = vmatpush1.xpose.msra.mxu0 0.0
    %656 = vmatprep.subr.mxu0 0.0
    %657 = vmatpush1.xpose.msra.mxu0 0.0
    %658 = vmatprep.subr.mxu0 0.0
    %659 = vmatpush1.xpose.msra.mxu0 0.0
    %660 = vmatprep.subr.mxu0 0.0
    %661 = vmatpush1.xpose.msra.mxu0 0.0
    %662 = vmatprep.subr.mxu0 0.0
    %663 = vmatpush1.xpose.msra.mxu0 0.0
    %664 = vmatprep.subr.mxu0 0.0
    %665 = vmatpush1.xpose.msra.mxu0 0.0
    %666 = vmatprep.subr.mxu0 0.0
    %667 = vmatpush1.xpose.msra.mxu0 0.0
    %668 = vmatprep.subr.mxu0 0.0
    %669 = vmatpush1.xpose.msra.mxu0 0.0
    %670 = vmatprep.subr.mxu0 0.0
    %671 = vmatpush1.xpose.msra.mxu0 0.0
    %672 = vmatprep.subr.mxu0 0.0
    %673 = vmatpush1.xpose.msra.mxu0 0.0
    %674 = vmatprep.subr.mxu0 0.0
    %675 = vmatpush1.xpose.msra.mxu0 0.0
    %676 = vmatprep.subr.mxu0 0.0
    %677 = vmatpush1.xpose.msra.mxu0 0.0
    %678 = vmatprep.subr.mxu0 0.0
    %679 = vmatpush1.xpose.msra.mxu0 0.0
    %680 = vmatprep.subr.mxu0 0.0
    %681 = vmatpush1.xpose.msra.mxu0 0.0
    %682 = vmatprep.subr.mxu0 0.0
    %683 = vmatpush1.xpose.msra.mxu0 0.0
    %684 = vmatprep.subr.mxu0 0.0
    %685 = vmatpush1.xpose.msra.mxu0 0.0
    %686 = vmatprep.subr.mxu0 0.0
    %687 = vmatpush1.xpose.msra.mxu0 0.0
    %688 = vmatprep.subr.mxu0 0.0
    %689 = vmatpush1.xpose.msra.mxu0 0.0
    %690 = vmatprep.subr.mxu0 0.0
    %691 = vmatpush1.xpose.msra.mxu0 0.0
    %692 = vmatprep.subr.mxu0 0.0
    %693 = vmatpush1.xpose.msra.mxu0 0.0
    %694 = vmatprep.subr.mxu0 0.0
    %695 = vmatpush1.xpose.msra.mxu0 0.0
    %696 = vmatprep.subr.mxu0 0.0
    %697 = vmatpush1.xpose.msra.mxu0 0.0
    %698 = vmatprep.mubr.f32.mxu0 0.0
    %v699 = vand.u32 %v88, 4294901760
    %700 = vmatmul.mubr.f32.gmra.mrb[0].mxu0 %v699
    %v701 = vpop.f32.mrb[0].mxu0
    %v702 = vadd.f32 %v572, %v701
    %v703 = vpop.f32.mrb[0].mxu0
    %704 = vmatprep.mubr.f32.mxu0 0.0
    %v705 = vand.u32 %v91, 4294901760
    %706 = vmatmul.mubr.f32.gmra.mrb[0].mxu0 %v705
    %v707 = vpop.f32.mrb[0].mxu0
    %v708 = vadd.f32 %v580, %v707
    %v709 = vpop.f32.mrb[0].mxu0
    %710 = vmatprep.mubr.f32.mxu0 0.0
    %v711 = vand.u32 %v94, 4294901760
    %712 = vmatmul.mubr.f32.gmra.mrb[0].mxu0 %v711
    %v713 = vpop.f32.mrb[0].mxu0
    %v714 = vadd.f32 %v588, %v713
    %v715 = vpop.f32.mrb[0].mxu0
    %716 = vmatprep.mubr.f32.mxu0 0.0
    %v717 = vand.u32 %v97, 4294901760
    %718 = vmatmul.mubr.f32.gmra.mrb[0].mxu0 %v717
    %v719 = vpop.f32.mrb[0].mxu0
    %v720 = vadd.f32 %v596, %v719
    %v721 = vpop.f32.mrb[0].mxu0
    %722 = vmatprep.mubr.f32.mxu0 0.0
    %v723 = vand.u32 %v100, 4294901760
    %724 = vmatmul.mubr.f32.gmra.mrb[0].mxu0 %v723
    %v725 = vpop.f32.mrb[0].mxu0
    %v726 = vadd.f32 %v604, %v725
    %v727 = vpop.f32.mrb[0].mxu0
    %728 = vmatprep.mubr.f32.mxu0 0.0
    %v729 = vand.u32 %v103, 4294901760
    %730 = vmatmul.mubr.f32.gmra.mrb[0].mxu0 %v729
    %v731 = vpop.f32.mrb[0].mxu0
    %v732 = vadd.f32 %v612, %v731
    %v733 = vpop.f32.mrb[0].mxu0
    %734 = vmatprep.mubr.f32.mxu0 0.0
    %v735 = vand.u32 %v106, 4294901760
    %736 = vmatmul.mubr.f32.gmra.mrb[0].mxu0 %v735
    %v737 = vpop.f32.mrb[0].mxu0
    %v738 = vadd.f32 %v620, %v737
    %v739 = vpop.f32.mrb[0].mxu0
    %740 = vmatprep.mubr.f32.mxu0 0.0
    %v741 = vand.u32 %v109, 4294901760
    %742 = vmatmul.mubr.f32.gmra.mrb[0].mxu0 %v741
    %v743 = vpop.f32.mrb[0].mxu0
    %v744 = vadd.f32 %v628, %v743
    %v745 = vpop.f32.mrb[0].mxu0
    %746 = vdwg.mxu0
    %747 = vmatprep.subr.mxu0 0.0
    %v748 = vand.u32 %v112, 4294901760
    %749 = vmatpush1.xpose.msra.mxu0 %v748
    %750 = vmatprep.subr.mxu0 0.0
    %751 = vmatpush1.xpose.msra.mxu0 0.0
    %752 = vmatprep.subr.mxu0 0.0
    %753 = vmatpush1.xpose.msra.mxu0 0.0
    %754 = vmatprep.subr.mxu0 0.0
    %755 = vmatpush1.xpose.msra.mxu0 0.0
    %756 = vmatprep.subr.mxu0 0.0
    %757 = vmatpush1.xpose.msra.mxu0 0.0
    %758 = vmatprep.subr.mxu0 0.0
    %759 = vmatpush1.xpose.msra.mxu0 0.0
    %760 = vmatprep.subr.mxu0 0.0
    %761 = vmatpush1.xpose.msra.mxu0 0.0
    %762 = vmatprep.subr.mxu0 0.0
    %763 = vmatpush1.xpose.msra.mxu0 0.0
    %764 = vmatprep.subr.mxu0 0.0
    %765 = vmatpush1.xpose.msra.mxu0 0.0
    %766 = vmatprep.subr.mxu0 0.0
    %767 = vmatpush1.xpose.msra.mxu0 0.0
    %768 = vmatprep.subr.mxu0 0.0
    %769 = vmatpush1.xpose.msra.mxu0 0.0
    %770 = vmatprep.subr.mxu0 0.0
    %771 = vmatpush1.xpose.msra.mxu0 0.0
    %772 = vmatprep.subr.mxu0 0.0
    %773 = vmatpush1.xpose.msra.mxu0 0.0
    %774 = vmatprep.subr.mxu0 0.0
    %775 = vmatpush1.xpose.msra.mxu0 0.0
    %776 = vmatprep.subr.mxu0 0.0
    %777 = vmatpush1.xpose.msra.mxu0 0.0
    %778 = vmatprep.subr.mxu0 0.0
    %779 = vmatpush1.xpose.msra.mxu0 0.0
    %780 = vmatprep.subr.mxu0 0.0
    %781 = vmatpush1.xpose.msra.mxu0 0.0
    %782 = vmatprep.subr.mxu0 0.0
    %783 = vmatpush1.xpose.msra.mxu0 0.0
    %784 = vmatprep.subr.mxu0 0.0
    %785 = vmatpush1.xpose.msra.mxu0 0.0
    %786 = vmatprep.subr.mxu0 0.0
    %787 = vmatpush1.xpose.msra.mxu0 0.0
    %788 = vmatprep.subr.mxu0 0.0
    %789 = vmatpush1.xpose.msra.mxu0 0.0
    %790 = vmatprep.subr.mxu0 0.0
    %791 = vmatpush1.xpose.msra.mxu0 0.0
    %792 = vmatprep.subr.mxu0 0.0
    %793 = vmatpush1.xpose.msra.mxu0 0.0
    %794 = vmatprep.subr.mxu0 0.0
    %795 = vmatpush1.xpose.msra.mxu0 0.0
    %796 = vmatprep.subr.mxu0 0.0
    %797 = vmatpush1.xpose.msra.mxu0 0.0
    %798 = vmatprep.subr.mxu0 0.0
    %799 = vmatpush1.xpose.msra.mxu0 0.0
    %800 = vmatprep.subr.mxu0 0.0
    %801 = vmatpush1.xpose.msra.mxu0 0.0
    %802 = vmatprep.subr.mxu0 0.0
    %803 = vmatpush1.xpose.msra.mxu0 0.0
    %804 = vmatprep.subr.mxu0 0.0
    %805 = vmatpush1.xpose.msra.mxu0 0.0
    %806 = vmatprep.subr.mxu0 0.0
    %807 = vmatpush1.xpose.msra.mxu0 0.0
    %808 = vmatprep.subr.mxu0 0.0
    %809 = vmatpush1.xpose.msra.mxu0 0.0
    %810 = vmatprep.subr.mxu0 0.0
    %811 = vmatpush1.xpose.msra.mxu0 0.0
    %812 = vmatprep.mubr.f32.mxu0 0.0
    %v813 = vand.u32 %v88, 4294901760
    %814 = vmatmul.mubr.f32.gmra.mrb[0].mxu0 %v813
    %v815 = vpop.f32.mrb[0].mxu0
    %v816 = vadd.f32 %v702, %v815
    %v817 = vpop.f32.mrb[0].mxu0
    %818 = vmatprep.mubr.f32.mxu0 0.0
    %v819 = vand.u32 %v91, 4294901760
    %820 = vmatmul.mubr.f32.gmra.mrb[0].mxu0 %v819
    %v821 = vpop.f32.mrb[0].mxu0
    %v822 = vadd.f32 %v708, %v821
    %v823 = vpop.f32.mrb[0].mxu0
    %824 = vmatprep.mubr.f32.mxu0 0.0
    %v825 = vand.u32 %v94, 4294901760
    %826 = vmatmul.mubr.f32.gmra.mrb[0].mxu0 %v825
    %v827 = vpop.f32.mrb[0].mxu0
    %v828 = vadd.f32 %v714, %v827
    %v829 = vpop.f32.mrb[0].mxu0
    %830 = vmatprep.mubr.f32.mxu0 0.0
    %v831 = vand.u32 %v97, 4294901760
    %832 = vmatmul.mubr.f32.gmra.mrb[0].mxu0 %v831
    %v833 = vpop.f32.mrb[0].mxu0
    %v834 = vadd.f32 %v720, %v833
    %v835 = vpop.f32.mrb[0].mxu0
    %836 = vmatprep.mubr.f32.mxu0 0.0
    %v837 = vand.u32 %v100, 4294901760
    %838 = vmatmul.mubr.f32.gmra.mrb[0].mxu0 %v837
    %v839 = vpop.f32.mrb[0].mxu0
    %v840 = vadd.f32 %v726, %v839
    %v841 = vpop.f32.mrb[0].mxu0
    %842 = vmatprep.mubr.f32.mxu0 0.0
    %v843 = vand.u32 %v103, 4294901760
    %844 = vmatmul.mubr.f32.gmra.mrb[0].mxu0 %v843
    %v845 = vpop.f32.mrb[0].mxu0
    %v846 = vadd.f32 %v732, %v845
    %v847 = vpop.f32.mrb[0].mxu0
    %848 = vmatprep.mubr.f32.mxu0 0.0
    %v849 = vand.u32 %v106, 4294901760
    %850 = vmatmul.mubr.f32.gmra.mrb[0].mxu0 %v849
    %v851 = vpop.f32.mrb[0].mxu0
    %v852 = vadd.f32 %v738, %v851
    %v853 = vpop.f32.mrb[0].mxu0
    %854 = vmatprep.mubr.f32.mxu0 0.0
    %v855 = vand.u32 %v109, 4294901760
    %856 = vmatmul.mubr.f32.gmra.mrb[0].mxu0 %v855
    %v857 = vpop.f32.mrb[0].mxu0
    %v858 = vadd.f32 %v744, %v857
    %v859 = vpop.f32.mrb[0].mxu0
    %860 = vdwg.mxu0
    %v861 = vmax.f32 %v816, 0.0
    %v862 = vmax.f32 %v822, 0.0
    %v863 = vmax.f32 %v828, 0.0
    %v864 = vmax.f32 %v834, 0.0
    %v865 = vmax.f32 %v840, 0.0
    %v866 = vmax.f32 %v846, 0.0
    %v867 = vmax.f32 %v852, 0.0
    %v868 = vmax.f32 %v858, 0.0
    %v869 = vld [vmem:[%s3] sm:$0xff]
    %v870 = vld [vmem:[%s3 + $0x8] sm:$0xff]
    %v871 = vld [vmem:[%s3 + $0x10] sm:$0xff]
    %v872 = vld [vmem:[%s3 + $0x18] sm:$0xff]
    %v873 = vld [vmem:[%s4] sm:$0xff]
    %v874 = vld [vmem:[%s4 + $0x8] sm:$0xff]
    %v875 = vld [vmem:[%s4 + $0x10] sm:$0xff]
    %v876 = vld [vmem:[%s4 + $0x18] sm:$0xff]
    %878 = vset.pattern.permute.xlu0 0
    %879 = vperm.xlu0 %878, %v873
    %v880 = vpop.permute.xlu0 %879
    %883 = vset.pattern.permute.xlu0 0
    %884 = vperm.xlu0 %883, %v874
    %v885 = vpop.permute.xlu0 %884
    %888 = vset.pattern.permute.xlu0 0
    %889 = vperm.xlu0 %888, %v875
    %v890 = vpop.permute.xlu0 %889
    %893 = vset.pattern.permute.xlu0 0
    %894 = vperm.xlu0 %893, %v876
    %v895 = vpop.permute.xlu0 %894
    %vm897 = vcmask 523264
    %v899 = vsel %vm897, %v869, 0
    %v902 = vsel %vm897, %v870, 0
    %v905 = vsel %vm897, %v871, 0
    %v908 = vsel %vm897, %v872, 0
    %910 = vmatprep.subr.mxu0 0.0
    %v911 = vand.u32 %v861, 4294901760
    %912 = vmatpush1.msra.mxu0 %v911
    %913 = vmatprep.subr.mxu0 0.0
    %v914 = vand.u32 %v862, 4294901760
    %915 = vmatpush1.msra.mxu0 %v914
    %916 = vmatprep.subr.mxu0 0.0
    %v917 = vand.u32 %v863, 4294901760
    %918 = vmatpush1.msra.mxu0 %v917
    %919 = vmatprep.subr.mxu0 0.0
    %v920 = vand.u32 %v864, 4294901760
    %921 = vmatpush1.msra.mxu0 %v920
    %922 = vmatprep.subr.mxu0 0.0
    %v923 = vand.u32 %v865, 4294901760
    %924 = vmatpush1.msra.mxu0 %v923
    %925 = vmatprep.subr.mxu0 0.0
    %v926 = vand.u32 %v866, 4294901760
    %927 = vmatpush1.msra.mxu0 %v926
    %928 = vmatprep.subr.mxu0 0.0
    %v929 = vand.u32 %v867, 4294901760
    %930 = vmatpush1.msra.mxu0 %v929
    %931 = vmatprep.subr.mxu0 0.0
    %v932 = vand.u32 %v868, 4294901760
    %933 = vmatpush1.msra.mxu0 %v932
    %934 = vmatprep.subr.mxu0 0.0
    %935 = vmatpush1.msra.mxu0 0.0
    %936 = vmatprep.subr.mxu0 0.0
    %937 = vmatpush1.msra.mxu0 0.0
    %938 = vmatprep.subr.mxu0 0.0
    %939 = vmatpush1.msra.mxu0 0.0
    %940 = vmatprep.subr.mxu0 0.0
    %941 = vmatpush1.msra.mxu0 0.0
    %942 = vmatprep.subr.mxu0 0.0
    %943 = vmatpush1.msra.mxu0 0.0
    %944 = vmatprep.subr.mxu0 0.0
    %945 = vmatpush1.msra.mxu0 0.0
    %946 = vmatprep.subr.mxu0 0.0
    %947 = vmatpush1.msra.mxu0 0.0
    %948 = vmatprep.subr.mxu0 0.0
    %949 = vmatpush1.msra.mxu0 0.0
    %950 = vmatprep.subr.mxu0 0.0
    %951 = vmatpush1.msra.mxu0 0.0
    %952 = vmatprep.subr.mxu0 0.0
    %953 = vmatpush1.msra.mxu0 0.0
    %954 = vmatprep.subr.mxu0 0.0
    %955 = vmatpush1.msra.mxu0 0.0
    %956 = vmatprep.subr.mxu0 0.0
    %957 = vmatpush1.msra.mxu0 0.0
    %958 = vmatprep.subr.mxu0 0.0
    %959 = vmatpush1.msra.mxu0 0.0
    %960 = vmatprep.subr.mxu0 0.0
    %961 = vmatpush1.msra.mxu0 0.0
    %962 = vmatprep.subr.mxu0 0.0
    %963 = vmatpush1.msra.mxu0 0.0
    %964 = vmatprep.subr.mxu0 0.0
    %965 = vmatpush1.msra.mxu0 0.0
    %966 = vmatprep.subr.mxu0 0.0
    %967 = vmatpush1.msra.mxu0 0.0
    %968 = vmatprep.subr.mxu0 0.0
    %969 = vmatpush1.msra.mxu0 0.0
    %970 = vmatprep.subr.mxu0 0.0
    %971 = vmatpush1.msra.mxu0 0.0
    %972 = vmatprep.subr.mxu0 0.0
    %973 = vmatpush1.msra.mxu0 0.0
    %974 = vmatprep.subr.mxu0 0.0
    %975 = vmatpush1.msra.mxu0 0.0
    %976 = vmatprep.subr.mxu0 0.0
    %977 = vmatpush1.msra.mxu0 0.0
    %978 = vmatprep.subr.mxu0 0.0
    %979 = vmatpush1.msra.mxu0 0.0
    %980 = vmatprep.subr.mxu0 0.0
    %981 = vmatpush1.msra.mxu0 0.0
    %982 = vmatprep.mubr.f32.mxu0 0.0
    %v983 = vand.u32 %v899, 4294901760
    %v984 = vsub.f32 %v899, %v983
    %v985 = vand.u32 %v984, 4294901760
    %v986 = vsub.f32 %v984, %v985
    %v987 = vand.u32 %v986, 4294901760
    %988 = vmatmul.mubr.f32.gmra.mrb[0].mxu0 %v987
    %v989 = vpop.f32.mrb[0].mxu0
    %v990 = vadd.f32 %v880, %v989
    %v991 = vpop.f32.mrb[0].mxu0
    %992 = vmatprep.mubr.f32.mxu0 0.0
    %v993 = vand.u32 %v902, 4294901760
    %v994 = vsub.f32 %v902, %v993
    %v995 = vand.u32 %v994, 4294901760
    %v996 = vsub.f32 %v994, %v995
    %v997 = vand.u32 %v996, 4294901760
    %998 = vmatmul.mubr.f32.gmra.mrb[0].mxu0 %v997
    %v999 = vpop.f32.mrb[0].mxu0
    %v1000 = vadd.f32 %v885, %v999
    %v1001 = vpop.f32.mrb[0].mxu0
    %1002 = vmatprep.mubr.f32.mxu0 0.0
    %v1003 = vand.u32 %v905, 4294901760
    %v1004 = vsub.f32 %v905, %v1003
    %v1005 = vand.u32 %v1004, 4294901760
    %v1006 = vsub.f32 %v1004, %v1005
    %v1007 = vand.u32 %v1006, 4294901760
    %1008 = vmatmul.mubr.f32.gmra.mrb[0].mxu0 %v1007
    %v1009 = vpop.f32.mrb[0].mxu0
    %v1010 = vadd.f32 %v890, %v1009
    %v1011 = vpop.f32.mrb[0].mxu0
    %1012 = vmatprep.mubr.f32.mxu0 0.0
    %v1013 = vand.u32 %v908, 4294901760
    %v1014 = vsub.f32 %v908, %v1013
    %v1015 = vand.u32 %v1014, 4294901760
    %v1016 = vsub.f32 %v1014, %v1015
    %v1017 = vand.u32 %v1016, 4294901760
    %1018 = vmatmul.mubr.f32.gmra.mrb[0].mxu0 %v1017
    %v1019 = vpop.f32.mrb[0].mxu0
    %v1020 = vadd.f32 %v895, %v1019
    %v1021 = vpop.f32.mrb[0].mxu0
    %1022 = vdwg.mxu0
    %1023 = vmatprep.subr.mxu0 0.0
    %v1024 = vand.u32 %v861, 4294901760
    %v1025 = vsub.f32 %v861, %v1024
    %v1026 = vand.u32 %v1025, 4294901760
    %v1027 = vsub.f32 %v1025, %v1026
    %v1028 = vand.u32 %v1027, 4294901760
    %1029 = vmatpush1.msra.mxu0 %v1028
    %1030 = vmatprep.subr.mxu0 0.0
    %v1031 = vand.u32 %v862, 4294901760
    %v1032 = vsub.f32 %v862, %v1031
    %v1033 = vand.u32 %v1032, 4294901760
    %v1034 = vsub.f32 %v1032, %v1033
    %v1035 = vand.u32 %v1034, 4294901760
    %1036 = vmatpush1.msra.mxu0 %v1035
    %1037 = vmatprep.subr.mxu0 0.0
    %v1038 = vand.u32 %v863, 4294901760
    %v1039 = vsub.f32 %v863, %v1038
    %v1040 = vand.u32 %v1039, 4294901760
    %v1041 = vsub.f32 %v1039, %v1040
    %v1042 = vand.u32 %v1041, 4294901760
    %1043 = vmatpush1.msra.mxu0 %v1042
    %1044 = vmatprep.subr.mxu0 0.0
    %v1045 = vand.u32 %v864, 4294901760
    %v1046 = vsub.f32 %v864, %v1045
    %v1047 = vand.u32 %v1046, 4294901760
    %v1048 = vsub.f32 %v1046, %v1047
    %v1049 = vand.u32 %v1048, 4294901760
    %1050 = vmatpush1.msra.mxu0 %v1049
    %1051 = vmatprep.subr.mxu0 0.0
    %v1052 = vand.u32 %v865, 4294901760
    %v1053 = vsub.f32 %v865, %v1052
    %v1054 = vand.u32 %v1053, 4294901760
    %v1055 = vsub.f32 %v1053, %v1054
    %v1056 = vand.u32 %v1055, 4294901760
    %1057 = vmatpush1.msra.mxu0 %v1056
    %1058 = vmatprep.subr.mxu0 0.0
    %v1059 = vand.u32 %v866, 4294901760
    %v1060 = vsub.f32 %v866, %v1059
    %v1061 = vand.u32 %v1060, 4294901760
    %v1062 = vsub.f32 %v1060, %v1061
    %v1063 = vand.u32 %v1062, 4294901760
    %1064 = vmatpush1.msra.mxu0 %v1063
    %1065 = vmatprep.subr.mxu0 0.0
    %v1066 = vand.u32 %v867, 4294901760
    %v1067 = vsub.f32 %v867, %v1066
    %v1068 = vand.u32 %v1067, 4294901760
    %v1069 = vsub.f32 %v1067, %v1068
    %v1070 = vand.u32 %v1069, 4294901760
    %1071 = vmatpush1.msra.mxu0 %v1070
    %1072 = vmatprep.subr.mxu0 0.0
    %v1073 = vand.u32 %v868, 4294901760
    %v1074 = vsub.f32 %v868, %v1073
    %v1075 = vand.u32 %v1074, 4294901760
    %v1076 = vsub.f32 %v1074, %v1075
    %v1077 = vand.u32 %v1076, 4294901760
    %1078 = vmatpush1.msra.mxu0 %v1077
    %1079 = vmatprep.subr.mxu0 0.0
    %1080 = vmatpush1.msra.mxu0 0.0
    %1081 = vmatprep.subr.mxu0 0.0
    %1082 = vmatpush1.msra.mxu0 0.0
    %1083 = vmatprep.subr.mxu0 0.0
    %1084 = vmatpush1.msra.mxu0 0.0
    %1085 = vmatprep.subr.mxu0 0.0
    %1086 = vmatpush1.msra.mxu0 0.0
    %1087 = vmatprep.subr.mxu0 0.0
    %1088 = vmatpush1.msra.mxu0 0.0
    %1089 = vmatprep.subr.mxu0 0.0
    %1090 = vmatpush1.msra.mxu0 0.0
    %1091 = vmatprep.subr.mxu0 0.0
    %1092 = vmatpush1.msra.mxu0 0.0
    %1093 = vmatprep.subr.mxu0 0.0
    %1094 = vmatpush1.msra.mxu0 0.0
    %1095 = vmatprep.subr.mxu0 0.0
    %1096 = vmatpush1.msra.mxu0 0.0
    %1097 = vmatprep.subr.mxu0 0.0
    %1098 = vmatpush1.msra.mxu0 0.0
    %1099 = vmatprep.subr.mxu0 0.0
    %1100 = vmatpush1.msra.mxu0 0.0
    %1101 = vmatprep.subr.mxu0 0.0
    %1102 = vmatpush1.msra.mxu0 0.0
    %1103 = vmatprep.subr.mxu0 0.0
    %1104 = vmatpush1.msra.mxu0 0.0
    %1105 = vmatprep.subr.mxu0 0.0
    %1106 = vmatpush1.msra.mxu0 0.0
    %1107 = vmatprep.subr.mxu0 0.0
    %1108 = vmatpush1.msra.mxu0 0.0
    %1109 = vmatprep.subr.mxu0 0.0
    %1110 = vmatpush1.msra.mxu0 0.0
    %1111 = vmatprep.subr.mxu0 0.0
    %1112 = vmatpush1.msra.mxu0 0.0
    %1113 = vmatprep.subr.mxu0 0.0
    %1114 = vmatpush1.msra.mxu0 0.0
    %1115 = vmatprep.subr.mxu0 0.0
    %1116 = vmatpush1.msra.mxu0 0.0
    %1117 = vmatprep.subr.mxu0 0.0
    %1118 = vmatpush1.msra.mxu0 0.0
    %1119 = vmatprep.subr.mxu0 0.0
    %1120 = vmatpush1.msra.mxu0 0.0
    %1121 = vmatprep.subr.mxu0 0.0
    %1122 = vmatpush1.msra.mxu0 0.0
    %1123 = vmatprep.subr.mxu0 0.0
    %1124 = vmatpush1.msra.mxu0 0.0
    %1125 = vmatprep.subr.mxu0 0.0
    %1126 = vmatpush1.msra.mxu0 0.0
    %1127 = vmatprep.mubr.f32.mxu0 0.0
    %v1128 = vand.u32 %v899, 4294901760
    %1129 = vmatmul.mubr.f32.gmra.mrb[0].mxu0 %v1128
    %v1130 = vpop.f32.mrb[0].mxu0
    %v1131 = vadd.f32 %v990, %v1130
    %v1132 = vpop.f32.mrb[0].mxu0
    %1133 = vmatprep.mubr.f32.mxu0 0.0
    %v1134 = vand.u32 %v902, 4294901760
    %1135 = vmatmul.mubr.f32.gmra.mrb[0].mxu0 %v1134
    %v1136 = vpop.f32.mrb[0].mxu0
    %v1137 = vadd.f32 %v1000, %v1136
    %v1138 = vpop.f32.mrb[0].mxu0
    %1139 = vmatprep.mubr.f32.mxu0 0.0
    %v1140 = vand.u32 %v905, 4294901760
    %1141 = vmatmul.mubr.f32.gmra.mrb[0].mxu0 %v1140
    %v1142 = vpop.f32.mrb[0].mxu0
    %v1143 = vadd.f32 %v1010, %v1142
    %v1144 = vpop.f32.mrb[0].mxu0
    %1145 = vmatprep.mubr.f32.mxu0 0.0
    %v1146 = vand.u32 %v908, 4294901760
    %1147 = vmatmul.mubr.f32.gmra.mrb[0].mxu0 %v1146
    %v1148 = vpop.f32.mrb[0].mxu0
    %v1149 = vadd.f32 %v1020, %v1148
    %v1150 = vpop.f32.mrb[0].mxu0
    %1151 = vdwg.mxu0
    %1152 = vmatprep.subr.mxu0 0.0
    %v1153 = vand.u32 %v861, 4294901760
    %v1154 = vsub.f32 %v861, %v1153
    %1155 = vmatpush1.msra.mxu0 %v1154
    %1156 = vmatprep.subr.mxu0 0.0
    %v1157 = vand.u32 %v862, 4294901760
    %v1158 = vsub.f32 %v862, %v1157
    %1159 = vmatpush1.msra.mxu0 %v1158
    %1160 = vmatprep.subr.mxu0 0.0
    %v1161 = vand.u32 %v863, 4294901760
    %v1162 = vsub.f32 %v863, %v1161
    %1163 = vmatpush1.msra.mxu0 %v1162
    %1164 = vmatprep.subr.mxu0 0.0
    %v1165 = vand.u32 %v864, 4294901760
    %v1166 = vsub.f32 %v864, %v1165
    %1167 = vmatpush1.msra.mxu0 %v1166
    %1168 = vmatprep.subr.mxu0 0.0
    %v1169 = vand.u32 %v865, 4294901760
    %v1170 = vsub.f32 %v865, %v1169
    %1171 = vmatpush1.msra.mxu0 %v1170
    %1172 = vmatprep.subr.mxu0 0.0
    %v1173 = vand.u32 %v866, 4294901760
    %v1174 = vsub.f32 %v866, %v1173
    %1175 = vmatpush1.msra.mxu0 %v1174
    %1176 = vmatprep.subr.mxu0 0.0
    %v1177 = vand.u32 %v867, 4294901760
    %v1178 = vsub.f32 %v867, %v1177
    %1179 = vmatpush1.msra.mxu0 %v1178
    %1180 = vmatprep.subr.mxu0 0.0
    %v1181 = vand.u32 %v868, 4294901760
    %v1182 = vsub.f32 %v868, %v1181
    %1183 = vmatpush1.msra.mxu0 %v1182
    %1184 = vmatprep.subr.mxu0 0.0
    %1185 = vmatpush1.msra.mxu0 0.0
    %1186 = vmatprep.subr.mxu0 0.0
    %1187 = vmatpush1.msra.mxu0 0.0
    %1188 = vmatprep.subr.mxu0 0.0
    %1189 = vmatpush1.msra.mxu0 0.0
    %1190 = vmatprep.subr.mxu0 0.0
    %1191 = vmatpush1.msra.mxu0 0.0
    %1192 = vmatprep.subr.mxu0 0.0
    %1193 = vmatpush1.msra.mxu0 0.0
    %1194 = vmatprep.subr.mxu0 0.0
    %1195 = vmatpush1.msra.mxu0 0.0
    %1196 = vmatprep.subr.mxu0 0.0
    %1197 = vmatpush1.msra.mxu0 0.0
    %1198 = vmatprep.subr.mxu0 0.0
    %1199 = vmatpush1.msra.mxu0 0.0
    %1200 = vmatprep.subr.mxu0 0.0
    %1201 = vmatpush1.msra.mxu0 0.0
    %1202 = vmatprep.subr.mxu0 0.0
    %1203 = vmatpush1.msra.mxu0 0.0
    %1204 = vmatprep.subr.mxu0 0.0
    %1205 = vmatpush1.msra.mxu0 0.0
    %1206 = vmatprep.subr.mxu0 0.0
    %1207 = vmatpush1.msra.mxu0 0.0
    %1208 = vmatprep.subr.mxu0 0.0
    %1209 = vmatpush1.msra.mxu0 0.0
    %1210 = vmatprep.subr.mxu0 0.0
    %1211 = vmatpush1.msra.mxu0 0.0
    %1212 = vmatprep.subr.mxu0 0.0
    %1213 = vmatpush1.msra.mxu0 0.0
    %1214 = vmatprep.subr.mxu0 0.0
    %1215 = vmatpush1.msra.mxu0 0.0
    %1216 = vmatprep.subr.mxu0 0.0
    %1217 = vmatpush1.msra.mxu0 0.0
    %1218 = vmatprep.subr.mxu0 0.0
    %1219 = vmatpush1.msra.mxu0 0.0
    %1220 = vmatprep.subr.mxu0 0.0
    %1221 = vmatpush1.msra.mxu0 0.0
    %1222 = vmatprep.subr.mxu0 0.0
    %1223 = vmatpush1.msra.mxu0 0.0
    %1224 = vmatprep.subr.mxu0 0.0
    %1225 = vmatpush1.msra.mxu0 0.0
    %1226 = vmatprep.subr.mxu0 0.0
    %1227 = vmatpush1.msra.mxu0 0.0
    %1228 = vmatprep.subr.mxu0 0.0
    %1229 = vmatpush1.msra.mxu0 0.0
    %1230 = vmatprep.subr.mxu0 0.0
    %1231 = vmatpush1.msra.mxu0 0.0
    %1232 = vmatprep.mubr.f32.mxu0 0.0
    %v1233 = vand.u32 %v899, 4294901760
    %v1234 = vsub.f32 %v899, %v1233
    %1235 = vmatmul.mubr.f32.gmra.mrb[0].mxu0 %v1234
    %v1236 = vpop.f32.mrb[0].mxu0
    %v1237 = vadd.f32 %v1131, %v1236
    %v1238 = vpop.f32.mrb[0].mxu0
    %1239 = vmatprep.mubr.f32.mxu0 0.0
    %v1240 = vand.u32 %v902, 4294901760
    %v1241 = vsub.f32 %v902, %v1240
    %1242 = vmatmul.mubr.f32.gmra.mrb[0].mxu0 %v1241
    %v1243 = vpop.f32.mrb[0].mxu0
    %v1244 = vadd.f32 %v1137, %v1243
    %v1245 = vpop.f32.mrb[0].mxu0
    %1246 = vmatprep.mubr.f32.mxu0 0.0
    %v1247 = vand.u32 %v905, 4294901760
    %v1248 = vsub.f32 %v905, %v1247
    %1249 = vmatmul.mubr.f32.gmra.mrb[0].mxu0 %v1248
    %v1250 = vpop.f32.mrb[0].mxu0
    %v1251 = vadd.f32 %v1143, %v1250
    %v1252 = vpop.f32.mrb[0].mxu0
    %1253 = vmatprep.mubr.f32.mxu0 0.0
    %v1254 = vand.u32 %v908, 4294901760
    %v1255 = vsub.f32 %v908, %v1254
    %1256 = vmatmul.mubr.f32.gmra.mrb[0].mxu0 %v1255
    %v1257 = vpop.f32.mrb[0].mxu0
    %v1258 = vadd.f32 %v1149, %v1257
    %v1259 = vpop.f32.mrb[0].mxu0
    %1260 = vdwg.mxu0
    %1261 = vmatprep.subr.mxu0 0.0
    %v1262 = vand.u32 %v861, 4294901760
    %1263 = vmatpush1.msra.mxu0 %v1262
    %1264 = vmatprep.subr.mxu0 0.0
    %v1265 = vand.u32 %v862, 4294901760
    %1266 = vmatpush1.msra.mxu0 %v1265
    %1267 = vmatprep.subr.mxu0 0.0
    %v1268 = vand.u32 %v863, 4294901760
    %1269 = vmatpush1.msra.mxu0 %v1268
    %1270 = vmatprep.subr.mxu0 0.0
    %v1271 = vand.u32 %v864, 4294901760
    %1272 = vmatpush1.msra.mxu0 %v1271
    %1273 = vmatprep.subr.mxu0 0.0
    %v1274 = vand.u32 %v865, 4294901760
    %1275 = vmatpush1.msra.mxu0 %v1274
    %1276 = vmatprep.subr.mxu0 0.0
    %v1277 = vand.u32 %v866, 4294901760
    %1278 = vmatpush1.msra.mxu0 %v1277
    %1279 = vmatprep.subr.mxu0 0.0
    %v1280 = vand.u32 %v867, 4294901760
    %1281 = vmatpush1.msra.mxu0 %v1280
    %1282 = vmatprep.subr.mxu0 0.0
    %v1283 = vand.u32 %v868, 4294901760
    %1284 = vmatpush1.msra.mxu0 %v1283
    %1285 = vmatprep.subr.mxu0 0.0
    %1286 = vmatpush1.msra.mxu0 0.0
    %1287 = vmatprep.subr.mxu0 0.0
    %1288 = vmatpush1.msra.mxu0 0.0
    %1289 = vmatprep.subr.mxu0 0.0
    %1290 = vmatpush1.msra.mxu0 0.0
    %1291 = vmatprep.subr.mxu0 0.0
    %1292 = vmatpush1.msra.mxu0 0.0
    %1293 = vmatprep.subr.mxu0 0.0
    %1294 = vmatpush1.msra.mxu0 0.0
    %1295 = vmatprep.subr.mxu0 0.0
    %1296 = vmatpush1.msra.mxu0 0.0
    %1297 = vmatprep.subr.mxu0 0.0
    %1298 = vmatpush1.msra.mxu0 0.0
    %1299 = vmatprep.subr.mxu0 0.0
    %1300 = vmatpush1.msra.mxu0 0.0
    %1301 = vmatprep.subr.mxu0 0.0
    %1302 = vmatpush1.msra.mxu0 0.0
    %1303 = vmatprep.subr.mxu0 0.0
    %1304 = vmatpush1.msra.mxu0 0.0
    %1305 = vmatprep.subr.mxu0 0.0
    %1306 = vmatpush1.msra.mxu0 0.0
    %1307 = vmatprep.subr.mxu0 0.0
    %1308 = vmatpush1.msra.mxu0 0.0
    %1309 = vmatprep.subr.mxu0 0.0
    %1310 = vmatpush1.msra.mxu0 0.0
    %1311 = vmatprep.subr.mxu0 0.0
    %1312 = vmatpush1.msra.mxu0 0.0
    %1313 = vmatprep.subr.mxu0 0.0
    %1314 = vmatpush1.msra.mxu0 0.0
    %1315 = vmatprep.subr.mxu0 0.0
    %1316 = vmatpush1.msra.mxu0 0.0
    %1317 = vmatprep.subr.mxu0 0.0
    %1318 = vmatpush1.msra.mxu0 0.0
    %1319 = vmatprep.subr.mxu0 0.0
    %1320 = vmatpush1.msra.mxu0 0.0
    %1321 = vmatprep.subr.mxu0 0.0
    %1322 = vmatpush1.msra.mxu0 0.0
    %1323 = vmatprep.subr.mxu0 0.0
    %1324 = vmatpush1.msra.mxu0 0.0
    %1325 = vmatprep.subr.mxu0 0.0
    %1326 = vmatpush1.msra.mxu0 0.0
    %1327 = vmatprep.subr.mxu0 0.0
    %1328 = vmatpush1.msra.mxu0 0.0
    %1329 = vmatprep.subr.mxu0 0.0
    %1330 = vmatpush1.msra.mxu0 0.0
    %1331 = vmatprep.subr.mxu0 0.0
    %1332 = vmatpush1.msra.mxu0 0.0
    %1333 = vmatprep.mubr.f32.mxu0 0.0
    %v1334 = vand.u32 %v899, 4294901760
    %v1335 = vsub.f32 %v899, %v1334
    %v1336 = vand.u32 %v1335, 4294901760
    %1337 = vmatmul.mubr.f32.gmra.mrb[0].mxu0 %v1336
    %v1338 = vpop.f32.mrb[0].mxu0
    %v1339 = vadd.f32 %v1237, %v1338
    %v1340 = vpop.f32.mrb[0].mxu0
    %1341 = vmatprep.mubr.f32.mxu0 0.0
    %v1342 = vand.u32 %v902, 4294901760
    %v1343 = vsub.f32 %v902, %v1342
    %v1344 = vand.u32 %v1343, 4294901760
    %1345 = vmatmul.mubr.f32.gmra.mrb[0].mxu0 %v1344
    %v1346 = vpop.f32.mrb[0].mxu0
    %v1347 = vadd.f32 %v1244, %v1346
    %v1348 = vpop.f32.mrb[0].mxu0
    %1349 = vmatprep.mubr.f32.mxu0 0.0
    %v1350 = vand.u32 %v905, 4294901760
    %v1351 = vsub.f32 %v905, %v1350
    %v1352 = vand.u32 %v1351, 4294901760
    %1353 = vmatmul.mubr.f32.gmra.mrb[0].mxu0 %v1352
    %v1354 = vpop.f32.mrb[0].mxu0
    %v1355 = vadd.f32 %v1251, %v1354
    %v1356 = vpop.f32.mrb[0].mxu0
    %1357 = vmatprep.mubr.f32.mxu0 0.0
    %v1358 = vand.u32 %v908, 4294901760
    %v1359 = vsub.f32 %v908, %v1358
    %v1360 = vand.u32 %v1359, 4294901760
    %1361 = vmatmul.mubr.f32.gmra.mrb[0].mxu0 %v1360
    %v1362 = vpop.f32.mrb[0].mxu0
    %v1363 = vadd.f32 %v1258, %v1362
    %v1364 = vpop.f32.mrb[0].mxu0
    %1365 = vdwg.mxu0
    %1366 = vmatprep.subr.mxu0 0.0
    %v1367 = vand.u32 %v861, 4294901760
    %v1368 = vsub.f32 %v861, %v1367
    %v1369 = vand.u32 %v1368, 4294901760
    %1370 = vmatpush1.msra.mxu0 %v1369
    %1371 = vmatprep.subr.mxu0 0.0
    %v1372 = vand.u32 %v862, 4294901760
    %v1373 = vsub.f32 %v862, %v1372
    %v1374 = vand.u32 %v1373, 4294901760
    %1375 = vmatpush1.msra.mxu0 %v1374
    %1376 = vmatprep.subr.mxu0 0.0
    %v1377 = vand.u32 %v863, 4294901760
    %v1378 = vsub.f32 %v863, %v1377
    %v1379 = vand.u32 %v1378, 4294901760
    %1380 = vmatpush1.msra.mxu0 %v1379
    %1381 = vmatprep.subr.mxu0 0.0
    %v1382 = vand.u32 %v864, 4294901760
    %v1383 = vsub.f32 %v864, %v1382
    %v1384 = vand.u32 %v1383, 4294901760
    %1385 = vmatpush1.msra.mxu0 %v1384
    %1386 = vmatprep.subr.mxu0 0.0
    %v1387 = vand.u32 %v865, 4294901760
    %v1388 = vsub.f32 %v865, %v1387
    %v1389 = vand.u32 %v1388, 4294901760
    %1390 = vmatpush1.msra.mxu0 %v1389
    %1391 = vmatprep.subr.mxu0 0.0
    %v1392 = vand.u32 %v866, 4294901760
    %v1393 = vsub.f32 %v866, %v1392
    %v1394 = vand.u32 %v1393, 4294901760
    %1395 = vmatpush1.msra.mxu0 %v1394
    %1396 = vmatprep.subr.mxu0 0.0
    %v1397 = vand.u32 %v867, 4294901760
    %v1398 = vsub.f32 %v867, %v1397
    %v1399 = vand.u32 %v1398, 4294901760
    %1400 = vmatpush1.msra.mxu0 %v1399
    %1401 = vmatprep.subr.mxu0 0.0
    %v1402 = vand.u32 %v868, 4294901760
    %v1403 = vsub.f32 %v868, %v1402
    %v1404 = vand.u32 %v1403, 4294901760
    %1405 = vmatpush1.msra.mxu0 %v1404
    %1406 = vmatprep.subr.mxu0 0.0
    %1407 = vmatpush1.msra.mxu0 0.0
    %1408 = vmatprep.subr.mxu0 0.0
    %1409 = vmatpush1.msra.mxu0 0.0
    %1410 = vmatprep.subr.mxu0 0.0
    %1411 = vmatpush1.msra.mxu0 0.0
    %1412 = vmatprep.subr.mxu0 0.0
    %1413 = vmatpush1.msra.mxu0 0.0
    %1414 = vmatprep.subr.mxu0 0.0
    %1415 = vmatpush1.msra.mxu0 0.0
    %1416 = vmatprep.subr.mxu0 0.0
    %1417 = vmatpush1.msra.mxu0 0.0
    %1418 = vmatprep.subr.mxu0 0.0
    %1419 = vmatpush1.msra.mxu0 0.0
    %1420 = vmatprep.subr.mxu0 0.0
    %1421 = vmatpush1.msra.mxu0 0.0
    %1422 = vmatprep.subr.mxu0 0.0
    %1423 = vmatpush1.msra.mxu0 0.0
    %1424 = vmatprep.subr.mxu0 0.0
    %1425 = vmatpush1.msra.mxu0 0.0
    %1426 = vmatprep.subr.mxu0 0.0
    %1427 = vmatpush1.msra.mxu0 0.0
    %1428 = vmatprep.subr.mxu0 0.0
    %1429 = vmatpush1.msra.mxu0 0.0
    %1430 = vmatprep.subr.mxu0 0.0
    %1431 = vmatpush1.msra.mxu0 0.0
    %1432 = vmatprep.subr.mxu0 0.0
    %1433 = vmatpush1.msra.mxu0 0.0
    %1434 = vmatprep.subr.mxu0 0.0
    %1435 = vmatpush1.msra.mxu0 0.0
    %1436 = vmatprep.subr.mxu0 0.0
    %1437 = vmatpush1.msra.mxu0 0.0
    %1438 = vmatprep.subr.mxu0 0.0
    %1439 = vmatpush1.msra.mxu0 0.0
    %1440 = vmatprep.subr.mxu0 0.0
    %1441 = vmatpush1.msra.mxu0 0.0
    %1442 = vmatprep.subr.mxu0 0.0
    %1443 = vmatpush1.msra.mxu0 0.0
    %1444 = vmatprep.subr.mxu0 0.0
    %1445 = vmatpush1.msra.mxu0 0.0
    %1446 = vmatprep.subr.mxu0 0.0
    %1447 = vmatpush1.msra.mxu0 0.0
    %1448 = vmatprep.subr.mxu0 0.0
    %1449 = vmatpush1.msra.mxu0 0.0
    %1450 = vmatprep.subr.mxu0 0.0
    %1451 = vmatpush1.msra.mxu0 0.0
    %1452 = vmatprep.subr.mxu0 0.0
    %1453 = vmatpush1.msra.mxu0 0.0
    %1454 = vmatprep.mubr.f32.mxu0 0.0
    %v1455 = vand.u32 %v899, 4294901760
    %1456 = vmatmul.mubr.f32.gmra.mrb[0].mxu0 %v1455
    %v1457 = vpop.f32.mrb[0].mxu0
    %v1458 = vadd.f32 %v1339, %v1457
    %v1459 = vpop.f32.mrb[0].mxu0
    %1460 = vmatprep.mubr.f32.mxu0 0.0
    %v1461 = vand.u32 %v902, 4294901760
    %1462 = vmatmul.mubr.f32.gmra.mrb[0].mxu0 %v1461
    %v1463 = vpop.f32.mrb[0].mxu0
    %v1464 = vadd.f32 %v1347, %v1463
    %v1465 = vpop.f32.mrb[0].mxu0
    %1466 = vmatprep.mubr.f32.mxu0 0.0
    %v1467 = vand.u32 %v905, 4294901760
    %1468 = vmatmul.mubr.f32.gmra.mrb[0].mxu0 %v1467
    %v1469 = vpop.f32.mrb[0].mxu0
    %v1470 = vadd.f32 %v1355, %v1469
    %v1471 = vpop.f32.mrb[0].mxu0
    %1472 = vmatprep.mubr.f32.mxu0 0.0
    %v1473 = vand.u32 %v908, 4294901760
    %1474 = vmatmul.mubr.f32.gmra.mrb[0].mxu0 %v1473
    %v1475 = vpop.f32.mrb[0].mxu0
    %v1476 = vadd.f32 %v1363, %v1475
    %v1477 = vpop.f32.mrb[0].mxu0
    %1478 = vdwg.mxu0
    %1479 = vmatprep.subr.mxu0 0.0
    %v1480 = vand.u32 %v861, 4294901760
    %1481 = vmatpush1.msra.mxu0 %v1480
    %1482 = vmatprep.subr.mxu0 0.0
    %v1483 = vand.u32 %v862, 4294901760
    %1484 = vmatpush1.msra.mxu0 %v1483
    %1485 = vmatprep.subr.mxu0 0.0
    %v1486 = vand.u32 %v863, 4294901760
    %1487 = vmatpush1.msra.mxu0 %v1486
    %1488 = vmatprep.subr.mxu0 0.0
    %v1489 = vand.u32 %v864, 4294901760
    %1490 = vmatpush1.msra.mxu0 %v1489
    %1491 = vmatprep.subr.mxu0 0.0
    %v1492 = vand.u32 %v865, 4294901760
    %1493 = vmatpush1.msra.mxu0 %v1492
    %1494 = vmatprep.subr.mxu0 0.0
    %v1495 = vand.u32 %v866, 4294901760
    %1496 = vmatpush1.msra.mxu0 %v1495
    %1497 = vmatprep.subr.mxu0 0.0
    %v1498 = vand.u32 %v867, 4294901760
    %1499 = vmatpush1.msra.mxu0 %v1498
    %1500 = vmatprep.subr.mxu0 0.0
    %v1501 = vand.u32 %v868, 4294901760
    %1502 = vmatpush1.msra.mxu0 %v1501
    %1503 = vmatprep.subr.mxu0 0.0
    %1504 = vmatpush1.msra.mxu0 0.0
    %1505 = vmatprep.subr.mxu0 0.0
    %1506 = vmatpush1.msra.mxu0 0.0
    %1507 = vmatprep.subr.mxu0 0.0
    %1508 = vmatpush1.msra.mxu0 0.0
    %1509 = vmatprep.subr.mxu0 0.0
    %1510 = vmatpush1.msra.mxu0 0.0
    %1511 = vmatprep.subr.mxu0 0.0
    %1512 = vmatpush1.msra.mxu0 0.0
    %1513 = vmatprep.subr.mxu0 0.0
    %1514 = vmatpush1.msra.mxu0 0.0
    %1515 = vmatprep.subr.mxu0 0.0
    %1516 = vmatpush1.msra.mxu0 0.0
    %1517 = vmatprep.subr.mxu0 0.0
    %1518 = vmatpush1.msra.mxu0 0.0
    %1519 = vmatprep.subr.mxu0 0.0
    %1520 = vmatpush1.msra.mxu0 0.0
    %1521 = vmatprep.subr.mxu0 0.0
    %1522 = vmatpush1.msra.mxu0 0.0
    %1523 = vmatprep.subr.mxu0 0.0
    %1524 = vmatpush1.msra.mxu0 0.0
    %1525 = vmatprep.subr.mxu0 0.0
    %1526 = vmatpush1.msra.mxu0 0.0
    %1527 = vmatprep.subr.mxu0 0.0
    %1528 = vmatpush1.msra.mxu0 0.0
    %1529 = vmatprep.subr.mxu0 0.0
    %1530 = vmatpush1.msra.mxu0 0.0
    %1531 = vmatprep.subr.mxu0 0.0
    %1532 = vmatpush1.msra.mxu0 0.0
    %1533 = vmatprep.subr.mxu0 0.0
    %1534 = vmatpush1.msra.mxu0 0.0
    %1535 = vmatprep.subr.mxu0 0.0
    %1536 = vmatpush1.msra.mxu0 0.0
    %1537 = vmatprep.subr.mxu0 0.0
    %1538 = vmatpush1.msra.mxu0 0.0
    %1539 = vmatprep.subr.mxu0 0.0
    %1540 = vmatpush1.msra.mxu0 0.0
    %1541 = vmatprep.subr.mxu0 0.0
    %1542 = vmatpush1.msra.mxu0 0.0
    %1543 = vmatprep.subr.mxu0 0.0
    %1544 = vmatpush1.msra.mxu0 0.0
    %1545 = vmatprep.subr.mxu0 0.0
    %1546 = vmatpush1.msra.mxu0 0.0
    %1547 = vmatprep.subr.mxu0 0.0
    %1548 = vmatpush1.msra.mxu0 0.0
    %1549 = vmatprep.subr.mxu0 0.0
    %1550 = vmatpush1.msra.mxu0 0.0
    %1551 = vmatprep.mubr.f32.mxu0 0.0
    %v1552 = vand.u32 %v899, 4294901760
    %1553 = vmatmul.mubr.f32.gmra.mrb[0].mxu0 %v1552
    %v1554 = vpop.f32.mrb[0].mxu0
    %v1555 = vadd.f32 %v1458, %v1554
    %v1556 = vpop.f32.mrb[0].mxu0
    %1557 = vmatprep.mubr.f32.mxu0 0.0
    %v1558 = vand.u32 %v902, 4294901760
    %1559 = vmatmul.mubr.f32.gmra.mrb[0].mxu0 %v1558
    %v1560 = vpop.f32.mrb[0].mxu0
    %v1561 = vadd.f32 %v1464, %v1560
    %v1562 = vpop.f32.mrb[0].mxu0
    %1563 = vmatprep.mubr.f32.mxu0 0.0
    %v1564 = vand.u32 %v905, 4294901760
    %1565 = vmatmul.mubr.f32.gmra.mrb[0].mxu0 %v1564
    %v1566 = vpop.f32.mrb[0].mxu0
    %v1567 = vadd.f32 %v1470, %v1566
    %v1568 = vpop.f32.mrb[0].mxu0
    %1569 = vmatprep.mubr.f32.mxu0 0.0
    %v1570 = vand.u32 %v908, 4294901760
    %1571 = vmatmul.mubr.f32.gmra.mrb[0].mxu0 %v1570
    %v1572 = vpop.f32.mrb[0].mxu0
    %v1573 = vadd.f32 %v1476, %v1572
    %v1574 = vpop.f32.mrb[0].mxu0
    %1575 = vdwg.mxu0
    %v1576 = vmax.f32 %v1555, 0.0
    %v1577 = vmax.f32 %v1561, 0.0
    %v1578 = vmax.f32 %v1567, 0.0
    %v1579 = vmax.f32 %v1573, 0.0
    %v1580 = vld [vmem:[%s5] sm:$0xff]
    %v1581 = vld [vmem:[%s5 + $0x8] sm:$0xff]
    %v1582 = vld [vmem:[%s5 + $0x10] sm:$0xff]
    %v1583 = vld [vmem:[%s5 + $0x18] sm:$0xff]
    %1585 = vset.pattern.permute.xlu0 0
    %1586 = vperm.xlu0 %1585, %v1580
    %v1587 = vpop.permute.xlu0 %1586
    %1590 = vset.pattern.permute.xlu0 0
    %1591 = vperm.xlu0 %1590, %v1581
    %v1592 = vpop.permute.xlu0 %1591
    %1595 = vset.pattern.permute.xlu0 0
    %1596 = vperm.xlu0 %1595, %v1582
    %v1597 = vpop.permute.xlu0 %1596
    %1600 = vset.pattern.permute.xlu0 0
    %1601 = vperm.xlu0 %1600, %v1583
    %v1602 = vpop.permute.xlu0 %1601
    %v1604 = vmul.f32 %v1576, %v1587
    %v1605 = vmul.f32 %v1577, %v1592
    %v1606 = vmul.f32 %v1578, %v1597
    %v1607 = vmul.f32 %v1579, %v1602
    %vm1608 = vcmask 64512
    %v1609 = vsel %vm1608, %v1604, 0.0
    %v1610 = vsel %vm1608, %v1605, 0.0
    %v1611 = vadd.f32 %v1609, %v1610
    %v1612 = vsel %vm1608, %v1606, 0.0
    %v1613 = vadd.f32 %v1611, %v1612
    %v1614 = vsel %vm1608, %v1607, 0.0
    %v1615 = vadd.f32 %v1613, %v1614
    %v1616 = vrot.slane %v1615, 4
    %v1617 = vadd.f32 %v1615, %v1616
    %v1618 = vrot.slane %v1617, 2
    %v1619 = vadd.f32 %v1617, %v1618
    %v1620 = vrot.slane %v1619, 1
    %v1621 = vadd.f32 %v1619, %v1620
    %v1622 = vld [vmem:[#allocation2] sm:$0x1]
    %1624 = vset.pattern.permute.xlu0 0
    %1625 = vperm.xlu0 %1624, %v1622
    %v1626 = vpop.permute.xlu0 %1625
    %v1628 = vlaneseq
    %v1629 = vshrl.u32 %v1628, 7
    %v1630 = vsub.s32 0, %v1629
    %v1631 = vrot.slane %v1626, %v1630
    %v1632 = vadd.f32 %v1621, %v1631
    %vm1633 = vcmask 57344
    %1634 = vst.msk [vmem:[#allocation3] sm:$0x1] %vm1633, %v1632
    // Predicated region
    $region30: #{tpu_custom_call.1} parent=1 // pred_check
      _
    $region31: #{tpu_custom_call.1} parent=1 // pred_check_branch
      %1636 = sbr.rel (0) target = $region33
    $region32: #{tpu_custom_call.1} parent=1 // pred_region
      %s1638 = ssub.s32 16, 16
      %1639 = vsyncadd [#allocation4], %s1638
      %s1641 = sshll.u32 [#allocation3], 4
      %s1642 = int_to_ptr.vmem [resolvable:$true] %s1641
      %1644 = dma.vmem_to_hbm [thread:$0]  %s1642, 16, %s7, [#allocation4]
    $region33: #{tpu_custom_call.1} parent=1 // pred_fallthru
      _
    // Predicated region
    $region34: #{tpu_custom_call.1} parent=1 // pred_check
      _
    $region35: #{tpu_custom_call.1} parent=1 // pred_check_branch
      %1646 = sbr.rel (0) target = $region37
    $region36: #{tpu_custom_call.1} parent=1 // pred_region
      %1647 = dma.done [#allocation4], 16
    $region37: #{tpu_custom_call.1} parent=1 // pred_fallthru
      _
    %1648 = vsyncpa [#allocation4], 1

</llo_original>
